<compile_context>
chip_gen: v7x
topology: tpu7x:2x2x1
jax: 0.10.0
libtpu: 0.0.40
codegen_flags: <defaults>
</compile_context>

<pallas_src>
import functools

import jax
import jax.numpy as jnp
from jax.experimental import pallas as pl
from jax.experimental.pallas import tpu as pltpu

_EPS = 1e-8
_R_EARTH = 6371000.0


# ----------------------------- Pallas kernel ------------------------------ #
def _pinn_loss_kernel(u_p_ref, v_p_ref, sp_p_ref, dlt_p_ref,
                      u_t_ref, v_t_ref, sp_t_ref, dlt_t_ref,
                      wlev_ref, coef_ref, out_ref, acc_ref,
                      *, w, tt, t_valid, t_padded):
    """One grid step == one (batch, TT-time-step block).

    u/v refs    : (TT*C, HW)  winds, rows are (time-major, level-minor) [VMEM]
    sp/dlt refs : (TT, HW)    surface pressure / precomputed dlog(sp)/dt
    wlev        : (TT, TT*C)  block-diagonal dplev weights (MXU operand)
    coef        : (6, HW)     stencil coefficient rows
                  rows = [cp_lon, c0_lon, cm_lon, cp_lat, c0_lat, cm_lat]
    out         : (8, 128)    per-batch scalar slot, written at last tb only
    acc         : (TT, HW)    running elementwise sum of squared residual diff
    """
    tb = pl.program_id(1)
    n_tb = pl.num_programs(1)

    @pl.when(tb == 0)
    def _():
        acc_ref[...] = jnp.zeros_like(acc_ref)

    coef = coef_ref[...]                              # (6, HW)
    hw = coef.shape[1]
    # Hoisted sublane broadcasts, shared by both residual() calls below.
    cp_lon = jnp.broadcast_to(coef[0:1], (tt, hw))
    c0_lon = jnp.broadcast_to(coef[1:2], (tt, hw))
    cm_lon = jnp.broadcast_to(coef[2:3], (tt, hw))
    cp_lat = jnp.broadcast_to(coef[3:4], (tt, hw))
    c0_lat = jnp.broadcast_to(coef[4:5], (tt, hw))
    cm_lat = jnp.broadcast_to(coef[5:6], (tt, hw))
    wlev = wlev_ref[...]                              # (TT, TT*C)

    def d_lon(x):                                     # (TT, HW) -> (TT, HW)
        x_e = pltpu.roll(x, hw - 1, 1)                # x[..., i+1] (east)
        x_w = pltpu.roll(x, 1, 1)                     # x[..., i-1] (west)
        return cp_lon * x_e + c0_lon * x + cm_lon * x_w

    def d_lat(x):                                     # (TT, HW) -> (TT, HW)
        x_s = pltpu.roll(x, hw - w, 1)                # x[..., i+W] (next lat row)
        x_n = pltpu.roll(x, w, 1)                     # x[..., i-W] (prev lat row)
        return cp_lat * x_s + c0_lat * x + cm_lat * x_n

    def residual(u_ref, v_ref, sp_ref, dlt_ref):
        # Level contraction on the MXU: the block-diagonal dplev matrix keeps
        # the TT time steps separate while summing dplev[c]*wind[c] over c.
        uu = jnp.dot(wlev, u_ref[...], preferred_element_type=jnp.float32)
        vv = jnp.dot(wlev, v_ref[...], preferred_element_type=jnp.float32)
        sp = sp_ref[...]                              # (TT, HW)
        inv_sp = pl.reciprocal(sp + _EPS, approx=True)   # EUP
        lsp = jnp.log(sp + _EPS)                         # EUP, once per (b,t)
        # sum_c (du/dx + dv/dy + u*dlsp_dx + v*dlsp_dy)[c] * dplev[c] / (sp+eps)
        integrated = (d_lon(uu) + d_lat(vv)
                      + uu * d_lon(lsp) + vv * d_lat(lsp)) * inv_sp
        # residual = d(log sp)/dt - (-integrated)
        return dlt_ref[...] + integrated              # (TT, HW)

    diff = (residual(u_p_ref, v_p_ref, sp_p_ref, dlt_p_ref)
            - residual(u_t_ref, v_t_ref, sp_t_ref, dlt_t_ref))

    if t_padded:  # static: only emitted when T was padded up to a TT multiple
        rows = jax.lax.broadcasted_iota(jnp.int32, (tt, hw), 0)
        diff = jnp.where(tb * tt + rows < t_valid, diff, 0.0)

    acc_ref[...] += diff * diff

    @pl.when(tb == n_tb - 1)
    def _():
        out_ref[...] = jnp.broadcast_to(jnp.sum(acc_ref[...]), (8, 128))


# ------------------------------- wrapper ----------------------------------- #
def surface_pressure_pinn_loss(u_p, v_p, sp_p, u_t, v_t, sp_t,
                               lat, atmos_levels, dt, dx, dy):
    B, T, C, H, W = u_p.shape
    assert T >= 2 and C >= 2 and H >= 2 and W >= 2, \
        "finite-difference stencils require T,C,H,W >= 2 (same as the torch module)"
    HW = H * W
    f32 = jnp.float32
    dt, dx, dy = float(dt), float(dx), float(dy)

    TT = 8 if T >= 8 else T                  # time steps per grid step (sublanes)
    TB = -(-T // TT)
    TPAD = TB * TT

    def prep_sp(sp):
        sp = sp.astype(f32).reshape(B, T, HW)
        lsp = jnp.log(sp + _EPS)
        first = (lsp[:, 1:2] - lsp[:, 0:1]) / (dt + _EPS)
        inner = (lsp[:, 2:] - lsp[:, :-2]) / (2.0 * dt + _EPS)
        last = (lsp[:, -1:] - lsp[:, -2:-1]) / (dt + _EPS)
        dlt = jnp.concatenate([first, inner, last], axis=1)      # (B, T, HW)
        if TPAD != T:
            sp = jnp.pad(sp, ((0, 0), (0, TPAD - T), (0, 0)), mode="edge")
            dlt = jnp.pad(dlt, ((0, 0), (0, TPAD - T), (0, 0)))
        return sp, dlt

    def prep_wind(x):
        x = x.astype(f32).reshape(B, T, C, HW)
        if TPAD != T:
            x = jnp.pad(x, ((0, 0), (0, TPAD - T), (0, 0), (0, 0)))
        return x.reshape(B, TPAD * C, HW)    # free reshape: rows = (t, c)

    spp, dltp = prep_sp(sp_p)
    spt, dltt = prep_sp(sp_t)
    up, vp = prep_wind(u_p), prep_wind(v_p)
    ut, vt = prep_wind(u_t), prep_wind(v_t)

    # delta_sigma[c] = dplev[c] / (sp + eps); block-diagonal form for the MXU.
    plev = atmos_levels.astype(f32) * 100.0                      # hPa -> Pa
    dplev = jnp.concatenate([plev[1:2] - plev[0:1],
                             (plev[2:] - plev[:-2]) * 0.5,
                             plev[-1:] - plev[-2:-1]]).astype(f32)   # (C,)
    wlev = jnp.kron(jnp.eye(TT, dtype=f32), dplev[None, :])      # (TT, TT*C)

    # Finite-difference coefficient rows (reciprocal denominators + one-sided
    # edge handling baked in).
    lat = lat.astype(f32)
    m_lon = (jnp.pi * _R_EARTH / 180.0) * jnp.cos(lat * jnp.pi / 180.0)   # (H,)
    m_lat = jnp.pi * _R_EARTH / 180.0
    inv_lon_edge = (1.0 / (dx * m_lon + _EPS))[:, None]          # (H, 1)
    inv_lon_int = (1.0 / (2.0 * dx * m_lon + _EPS))[:, None]
    inv_lat_edge = 1.0 / (dy * m_lat + _EPS)                     # scalar
    inv_lat_int = 1.0 / (2.0 * dy * m_lat + _EPS)

    col = jnp.arange(W)[None, :]
    row = jnp.arange(H)[:, None]
    c_first, c_last = col == 0, col == W - 1
    r_first, r_last = row == 0, row == H - 1
    zero = jnp.zeros((H, W), f32)

    cp_lon = jnp.where(c_first, inv_lon_edge, jnp.where(c_last, zero, inv_lon_int))
    c0_lon = jnp.where(c_first, -inv_lon_edge, jnp.where(c_last, inv_lon_edge, zero))
    cm_lon = jnp.where(c_first, zero, jnp.where(c_last, -inv_lon_edge, -inv_lon_int))
    cp_lat = jnp.where(r_first, inv_lat_edge, jnp.where(r_last, 0.0, inv_lat_int)) + zero
    c0_lat = jnp.where(r_first, -inv_lat_edge, jnp.where(r_last, inv_lat_edge, 0.0)) + zero
    cm_lat = jnp.where(r_first, 0.0, jnp.where(r_last, -inv_lat_edge, -inv_lat_int)) + zero
    coef = jnp.stack([cp_lon, c0_lon, cm_lon,
                      cp_lat, c0_lat, cm_lat]).reshape(6, HW).astype(f32)

    kernel = functools.partial(_pinn_loss_kernel, w=W, tt=TT,
                               t_valid=T, t_padded=(TPAD != T))

    wind_spec = pl.BlockSpec((None, TT * C, HW), lambda b, tb: (b, tb, 0))
    scal_spec = pl.BlockSpec((None, TT, HW), lambda b, tb: (b, tb, 0))
    wlev_spec = pl.BlockSpec((TT, TT * C), lambda b, tb: (0, 0))
    coef_spec = pl.BlockSpec((6, HW), lambda b, tb: (0, 0))

    # TODO(synk): at weather-model resolution (e.g. 721x1440) the flattened
    # (HW)-lane roll stencil cannot be tiled; switch to an (H, W_pad) layout
    # tiled along H with a +/-1-row halo via the index_map before scaling up.
    per_batch = pl.pallas_call(
        kernel,
        out_shape=jax.ShapeDtypeStruct((B, 8, 128), f32),
        grid=(B, TB),
        in_specs=[wind_spec, wind_spec, scal_spec, scal_spec,
                  wind_spec, wind_spec, scal_spec, scal_spec,
                  wlev_spec, coef_spec],
        out_specs=pl.BlockSpec((None, 8, 128), lambda b, tb: (b, 0, 0)),
        scratch_shapes=[pltpu.VMEM((TT, HW), f32)],
        compiler_params=pltpu.CompilerParams(
            dimension_semantics=("parallel", "arbitrary"),
            vmem_limit_bytes=32 * 1024 * 1024),
    )(up, vp, spp, dltp, ut, vt, spt, dltt, wlev, coef)

    # Global mean uses the global element count B*T*H*W.
    return jnp.sum(per_batch[:, 0, 0]) / (B * T * H * W)


# ------------------------ pure-JAX reference check ------------------------- #
def _space_derivative_ref(x, lat, dx, dy):
    lat_rad = lat * jnp.pi / 180.0
    m_lat = jnp.pi * _R_EARTH / 180.0 * jnp.ones_like(lat_rad)
    m_lon = jnp.pi * _R_EARTH / 180.0 * jnp.cos(lat_rad)
    rs = (1, 1, 1, -1, 1) if x.ndim == 5 else (1, 1, -1, 1)
    ady = dy * m_lat.reshape(rs)
    adx = dx * m_lon.reshape(rs)
    der_lat = jnp.zeros_like(x)
    der_lon = jnp.zeros_like(x)
    der_lat = der_lat.at[..., 1:-1, :].set(
        (x[..., 2:, :] - x[..., :-2, :]) / (2.0 * ady[..., 1:-1, :] + _EPS))
    der_lat = der_lat.at[..., 0:1, :].set(
        (x[..., 1:2, :] - x[..., 0:1, :]) / (ady[..., 0:1, :] + _EPS))
    der_lat = der_lat.at[..., -1:, :].set(
        (x[..., -1:, :] - x[..., -2:-1, :]) / (ady[..., -1:, :] + _EPS))
    der_lon = der_lon.at[..., :, 1:-1].set(
        (x[..., :, 2:] - x[..., :, :-2]) / (2.0 * adx[..., :, 0:1] + _EPS))
    der_lon = der_lon.at[..., :, 0:1].set(
        (x[..., :, 1:2] - x[..., :, 0:1]) / (adx[..., :, 0:1] + _EPS))
    der_lon = der_lon.at[..., :, -1:].set(
        (x[..., :, -1:] - x[..., :, -2:-1]) / (adx[..., :, 0:1] + _EPS))
    return der_lat, der_lon


def _residual_ref(u, v, sp, lat, levels, dt, dx, dy):
    log_sp = jnp.log(sp + _EPS)
    der_t = jnp.zeros_like(log_sp)
    der_t = der_t.at[:, 1:-1].set((log_sp[:, 2:] - log_sp[:, :-2]) / (2.0 * dt + _EPS))
    der_t = der_t.at[:, 0].set((log_sp[:, 1] - log_sp[:, 0]) / (dt + _EPS))
    der_t = der_t.at[:, -1].set((log_sp[:, -1] - log_sp[:, -2]) / (dt + _EPS))
    _, du_dx = _space_derivative_ref(u, lat, dx, dy)
    dv_dy, _ = _space_derivative_ref(v, lat, dx, dy)
    divergence = du_dx + dv_dy
    dlsp_dy, dlsp_dx = _space_derivative_ref(log_sp, lat, dx, dy)
    advection = u * dlsp_dx[:, :, None] + v * dlsp_dy[:, :, None]
    total = divergence + advection
    p_levels = (levels.astype(jnp.float32) * 100.0).reshape(1, 1, -1, 1, 1)
    sigma = p_levels / (sp[:, :, None] + _EPS)
    dsig = jnp.zeros_like(sigma)
    dsig = dsig.at[:, :, 1:-1].set((sigma[:, :, 2:] - sigma[:, :, :-2]) / 2.0)
    dsig = dsig.at[:, :, 0].set(sigma[:, :, 1] - sigma[:, :, 0])
    dsig = dsig.at[:, :, -1].set(sigma[:, :, -1] - sigma[:, :, -2])
    integrated = jnp.sum(total * dsig, axis=2)
    return der_t + integrated


def _loss_ref(u_p, v_p, sp_p, u_t, v_t, sp_t, lat, levels, dt, dx, dy):
    r_m = _residual_ref(u_p, v_p, sp_p, lat, levels, dt, dx, dy)
    r_e = _residual_ref(u_t, v_t, sp_t, lat, levels, dt, dx, dy)
    return jnp.mean(jnp.square(r_m - r_e))


# --------------------------------- main ------------------------------------ #
if __name__ == "__main__":
    key = jax.random.PRNGKey(0)
    B, T, C, H, W = 2, 16, 4, 16, 16
    ks = jax.random.split(key, 6)
    u_p = jax.random.normal(ks[0], (B, T, C, H, W), jnp.float32) * 10.0
    v_p = jax.random.normal(ks[1], (B, T, C, H, W), jnp.float32) * 10.0
    sp_p = 90000.0 + 2000.0 * jax.random.normal(ks[2], (B, T, H, W), jnp.float32)
    u_t = jax.random.normal(ks[3], (B, T, C, H, W), jnp.float32) * 10.0
    v_t = jax.random.normal(ks[4], (B, T, C, H, W), jnp.float32) * 10.0
    sp_t = 90000.0 + 2000.0 * jax.random.normal(ks[5], (B, T, H, W), jnp.float32)

    lat = jnp.linspace(90.0, -90.0, H, dtype=jnp.float32)                # metadata.lat
    atmos_levels = jnp.array([300.0, 500.0, 700.0, 850.0], jnp.float32)  # hPa
    dt, dx, dy = 6.0, 0.25, 0.25

    loss = surface_pressure_pinn_loss(u_p, v_p, sp_p, u_t, v_t, sp_t,
                                      lat, atmos_levels, dt, dx, dy)
    loss = jax.block_until_ready(loss)

    ref = jax.block_until_ready(
        _loss_ref(u_p, v_p, sp_p, u_t, v_t, sp_t, lat, atmos_levels, dt, dx, dy))

    assert bool(jnp.isfinite(loss)), "non-finite loss"
    # approx-reciprocal (EUP) + reordered level contraction -> not bit exact.
    assert jnp.allclose(loss, ref, rtol=5e-3, atol=1e-12), (loss, ref)
    print("KERNEL_OK")
</pallas_src>

<mosaic_0001>
module attributes {stable_mosaic.version = 11 : i64} {
  func.func @_pinn_loss_kernel(%arg0: i32, %arg1: i32, %arg2: memref<1x32x256xf32, #tpu.memory_space<vmem>>, %arg3: memref<1x32x256xf32, #tpu.memory_space<vmem>>, %arg4: memref<1x8x256xf32, #tpu.memory_space<vmem>>, %arg5: memref<1x8x256xf32, #tpu.memory_space<vmem>>, %arg6: memref<1x32x256xf32, #tpu.memory_space<vmem>>, %arg7: memref<1x32x256xf32, #tpu.memory_space<vmem>>, %arg8: memref<1x8x256xf32, #tpu.memory_space<vmem>>, %arg9: memref<1x8x256xf32, #tpu.memory_space<vmem>>, %arg10: memref<8x32xf32, #tpu.memory_space<vmem>>, %arg11: memref<6x256xf32, #tpu.memory_space<vmem>>, %arg12: memref<1x8x128xf32, #tpu.memory_space<vmem>>, %arg13: memref<8x256xf32, #tpu.memory_space<vmem>>) attributes {dimension_semantics = [#tpu.dimension_semantics<parallel>, #tpu.dimension_semantics<arbitrary>], iteration_bounds = array<i64: 2, 2>, scalar_prefetch = 0 : i64, scratch_operands = 1 : i64, tpu.core_type = #tpu.core_type<tc>, window_params = [{transform_indices = @transform_0, window_bounds = array<i64: 1, 32, 256>}, {transform_indices = @transform_1, window_bounds = array<i64: 1, 32, 256>}, {transform_indices = @transform_2, window_bounds = array<i64: 1, 8, 256>}, {transform_indices = @transform_3, window_bounds = array<i64: 1, 8, 256>}, {transform_indices = @transform_4, window_bounds = array<i64: 1, 32, 256>}, {transform_indices = @transform_5, window_bounds = array<i64: 1, 32, 256>}, {transform_indices = @transform_6, window_bounds = array<i64: 1, 8, 256>}, {transform_indices = @transform_7, window_bounds = array<i64: 1, 8, 256>}, {pipeline_mode = #tpu.pipeline_mode<synchronous>, transform_indices = @transform_8, window_bounds = array<i64: 8, 32>}, {pipeline_mode = #tpu.pipeline_mode<synchronous>, transform_indices = @transform_9, window_bounds = array<i64: 6, 256>}, {transform_indices = @transform_10, window_bounds = array<i64: 1, 8, 128>}]} {
    %c0_i32 = arith.constant 0 : i32
    %0 = arith.cmpi eq, %arg1, %c0_i32 : i32
    %1 = arith.extui %0 : i1 to i32
    %c0_i32_0 = arith.constant 0 : i32
    %2 = arith.cmpi ne, %1, %c0_i32_0 : i32
    scf.if %2 {
      %cst_53 = arith.constant 0.000000e+00 : f32
      %133 = vector.broadcast %cst_53 : f32 to vector<8x256xf32>
      %c0_54 = arith.constant 0 : index
      %c0_55 = arith.constant 0 : index
      %134 = vector.load %arg13[%c0_54, %c0_55] : memref<8x256xf32, #tpu.memory_space<vmem>>, vector<8x256xf32>
      tpu.vector_store %arg13[%c0_54, %c0_55], %133 {strides = array<i32>} : memref<8x256xf32, #tpu.memory_space<vmem>>, vector<8x256xf32>,
    } else {
    }
    %c0 = arith.constant 0 : index
    %c0_1 = arith.constant 0 : index
    %3 = vector.load %arg11[%c0, %c0_1] : memref<6x256xf32, #tpu.memory_space<vmem>>, vector<6x256xf32>
    %4 = vector.extract_strided_slice %3 {offsets = [0, 0], sizes = [1, 256], strides = [1, 1]} : vector<6x256xf32> to vector<1x256xf32>
    %5 = vector.shape_cast %4 : vector<1x256xf32> to vector<1x256xf32>
    %6 = vector.broadcast %5 : vector<1x256xf32> to vector<8x256xf32>
    %7 = vector.extract_strided_slice %3 {offsets = [1, 0], sizes = [1, 256], strides = [1, 1]} : vector<6x256xf32> to vector<1x256xf32>
    %8 = vector.shape_cast %7 : vector<1x256xf32> to vector<1x256xf32>
    %9 = vector.broadcast %8 : vector<1x256xf32> to vector<8x256xf32>
    %10 = vector.extract_strided_slice %3 {offsets = [2, 0], sizes = [1, 256], strides = [1, 1]} : vector<6x256xf32> to vector<1x256xf32>
    %11 = vector.shape_cast %10 : vector<1x256xf32> to vector<1x256xf32>
    %12 = vector.broadcast %11 : vector<1x256xf32> to vector<8x256xf32>
    %13 = vector.extract_strided_slice %3 {offsets = [3, 0], sizes = [1, 256], strides = [1, 1]} : vector<6x256xf32> to vector<1x256xf32>
    %14 = vector.shape_cast %13 : vector<1x256xf32> to vector<1x256xf32>
    %15 = vector.broadcast %14 : vector<1x256xf32> to vector<8x256xf32>
    %16 = vector.extract_strided_slice %3 {offsets = [4, 0], sizes = [1, 256], strides = [1, 1]} : vector<6x256xf32> to vector<1x256xf32>
    %17 = vector.shape_cast %16 : vector<1x256xf32> to vector<1x256xf32>
    %18 = vector.broadcast %17 : vector<1x256xf32> to vector<8x256xf32>
    %19 = vector.extract_strided_slice %3 {offsets = [5, 0], sizes = [1, 256], strides = [1, 1]} : vector<6x256xf32> to vector<1x256xf32>
    %20 = vector.shape_cast %19 : vector<1x256xf32> to vector<1x256xf32>
    %21 = vector.broadcast %20 : vector<1x256xf32> to vector<8x256xf32>
    %c0_2 = arith.constant 0 : index
    %c0_3 = arith.constant 0 : index
    %22 = vector.load %arg10[%c0_2, %c0_3] : memref<8x32xf32, #tpu.memory_space<vmem>>, vector<8x32xf32>
    %c0_4 = arith.constant 0 : index
    %c0_5 = arith.constant 0 : index
    %c0_6 = arith.constant 0 : index
    %23 = vector.load %arg2[%c0_4, %c0_5, %c0_6] : memref<1x32x256xf32, #tpu.memory_space<vmem>>, vector<1x32x256xf32>
    %24 = vector.shape_cast %23 : vector<1x32x256xf32> to vector<32x256xf32>
    %cst = arith.constant dense<0.000000e+00> : vector<8x256xf32>
    %25 = tpu.matmul %22, %24, %cst {dimension_numbers = #tpu.dot_dimension_numbers<[1], [0], [0], [1], [0, 0, 1, 1], [], []>} : vector<8x32xf32>, vector<32x256xf32>, vector<8x256xf32> -> vector<8x256xf32>
    %c0_7 = arith.constant 0 : index
    %c0_8 = arith.constant 0 : index
    %c0_9 = arith.constant 0 : index
    %26 = vector.load %arg3[%c0_7, %c0_8, %c0_9] : memref<1x32x256xf32, #tpu.memory_space<vmem>>, vector<1x32x256xf32>
    %27 = vector.shape_cast %26 : vector<1x32x256xf32> to vector<32x256xf32>
    %cst_10 = arith.constant dense<0.000000e+00> : vector<8x256xf32>
    %28 = tpu.matmul %22, %27, %cst_10 {dimension_numbers = #tpu.dot_dimension_numbers<[1], [0], [0], [1], [0, 0, 1, 1], [], []>} : vector<8x32xf32>, vector<32x256xf32>, vector<8x256xf32> -> vector<8x256xf32>
    %c0_11 = arith.constant 0 : index
    %c0_12 = arith.constant 0 : index
    %c0_13 = arith.constant 0 : index
    %29 = vector.load %arg4[%c0_11, %c0_12, %c0_13] : memref<1x8x256xf32, #tpu.memory_space<vmem>>, vector<1x8x256xf32>
    %30 = vector.shape_cast %29 : vector<1x8x256xf32> to vector<8x256xf32>
    %cst_14 = arith.constant 9.99999993E-9 : f32
    %31 = vector.broadcast %cst_14 : f32 to vector<8x256xf32>
    %32 = arith.addf %30, %31 : vector<8x256xf32>
    %33 = tpu.reciprocal %32 {approx = true} : vector<8x256xf32> -> vector<8x256xf32>
    %cst_15 = arith.constant 9.99999993E-9 : f32
    %34 = vector.broadcast %cst_15 : f32 to vector<8x256xf32>
    %35 = arith.addf %30, %34 : vector<8x256xf32>
    %36 = math.log %35 : vector<8x256xf32>
    %c255_i32 = arith.constant 255 : i32
    %37 = tpu.dynamic_rotate %25 by %c255_i32 dim 1 : vector<8x256xf32>, i32 -> vector<8x256xf32>
    %c1_i32 = arith.constant 1 : i32
    %38 = tpu.dynamic_rotate %25 by %c1_i32 dim 1 : vector<8x256xf32>, i32 -> vector<8x256xf32>
    %39 = arith.mulf %6, %37 : vector<8x256xf32>
    %40 = arith.mulf %9, %25 : vector<8x256xf32>
    %41 = arith.addf %39, %40 : vector<8x256xf32>
    %42 = arith.mulf %12, %38 : vector<8x256xf32>
    %43 = arith.addf %41, %42 : vector<8x256xf32>
    %c240_i32 = arith.constant 240 : i32
    %44 = tpu.dynamic_rotate %28 by %c240_i32 dim 1 : vector<8x256xf32>, i32 -> vector<8x256xf32>
    %c16_i32 = arith.constant 16 : i32
    %45 = tpu.dynamic_rotate %28 by %c16_i32 dim 1 : vector<8x256xf32>, i32 -> vector<8x256xf32>
    %46 = arith.mulf %15, %44 : vector<8x256xf32>
    %47 = arith.mulf %18, %28 : vector<8x256xf32>
    %48 = arith.addf %46, %47 : vector<8x256xf32>
    %49 = arith.mulf %21, %45 : vector<8x256xf32>
    %50 = arith.addf %48, %49 : vector<8x256xf32>
    %51 = arith.addf %43, %50 : vector<8x256xf32>
    %c255_i32_16 = arith.constant 255 : i32
    %52 = tpu.dynamic_rotate %36 by %c255_i32_16 dim 1 : vector<8x256xf32>, i32 -> vector<8x256xf32>
    %c1_i32_17 = arith.constant 1 : i32
    %53 = tpu.dynamic_rotate %36 by %c1_i32_17 dim 1 : vector<8x256xf32>, i32 -> vector<8x256xf32>
    %54 = arith.mulf %6, %52 : vector<8x256xf32>
    %55 = arith.mulf %9, %36 : vector<8x256xf32>
    %56 = arith.addf %54, %55 : vector<8x256xf32>
    %57 = arith.mulf %12, %53 : vector<8x256xf32>
    %58 = arith.addf %56, %57 : vector<8x256xf32>
    %59 = arith.mulf %25, %58 : vector<8x256xf32>
    %60 = arith.addf %51, %59 : vector<8x256xf32>
    %c240_i32_18 = arith.constant 240 : i32
    %61 = tpu.dynamic_rotate %36 by %c240_i32_18 dim 1 : vector<8x256xf32>, i32 -> vector<8x256xf32>
    %c16_i32_19 = arith.constant 16 : i32
    %62 = tpu.dynamic_rotate %36 by %c16_i32_19 dim 1 : vector<8x256xf32>, i32 -> vector<8x256xf32>
    %63 = arith.mulf %15, %61 : vector<8x256xf32>
    %64 = arith.mulf %18, %36 : vector<8x256xf32>
    %65 = arith.addf %63, %64 : vector<8x256xf32>
    %66 = arith.mulf %21, %62 : vector<8x256xf32>
    %67 = arith.addf %65, %66 : vector<8x256xf32>
    %68 = arith.mulf %28, %67 : vector<8x256xf32>
    %69 = arith.addf %60, %68 : vector<8x256xf32>
    %70 = arith.mulf %69, %33 : vector<8x256xf32>
    %c0_20 = arith.constant 0 : index
    %c0_21 = arith.constant 0 : index
    %c0_22 = arith.constant 0 : index
    %71 = vector.load %arg5[%c0_20, %c0_21, %c0_22] : memref<1x8x256xf32, #tpu.memory_space<vmem>>, vector<1x8x256xf32>
    %72 = vector.shape_cast %71 : vector<1x8x256xf32> to vector<8x256xf32>
    %73 = arith.addf %72, %70 : vector<8x256xf32>
    %c0_23 = arith.constant 0 : index
    %c0_24 = arith.constant 0 : index
    %c0_25 = arith.constant 0 : index
    %74 = vector.load %arg6[%c0_23, %c0_24, %c0_25] : memref<1x32x256xf32, #tpu.memory_space<vmem>>, vector<1x32x256xf32>
    %75 = vector.shape_cast %74 : vector<1x32x256xf32> to vector<32x256xf32>
    %cst_26 = arith.constant dense<0.000000e+00> : vector<8x256xf32>
    %76 = tpu.matmul %22, %75, %cst_26 {dimension_numbers = #tpu.dot_dimension_numbers<[1], [0], [0], [1], [0, 0, 1, 1], [], []>} : vector<8x32xf32>, vector<32x256xf32>, vector<8x256xf32> -> vector<8x256xf32>
    %c0_27 = arith.constant 0 : index
    %c0_28 = arith.constant 0 : index
    %c0_29 = arith.constant 0 : index
    %77 = vector.load %arg7[%c0_27, %c0_28, %c0_29] : memref<1x32x256xf32, #tpu.memory_space<vmem>>, vector<1x32x256xf32>
    %78 = vector.shape_cast %77 : vector<1x32x256xf32> to vector<32x256xf32>
    %cst_30 = arith.constant dense<0.000000e+00> : vector<8x256xf32>
    %79 = tpu.matmul %22, %78, %cst_30 {dimension_numbers = #tpu.dot_dimension_numbers<[1], [0], [0], [1], [0, 0, 1, 1], [], []>} : vector<8x32xf32>, vector<32x256xf32>, vector<8x256xf32> -> vector<8x256xf32>
    %c0_31 = arith.constant 0 : index
    %c0_32 = arith.constant 0 : index
    %c0_33 = arith.constant 0 : index
    %80 = vector.load %arg8[%c0_31, %c0_32, %c0_33] : memref<1x8x256xf32, #tpu.memory_space<vmem>>, vector<1x8x256xf32>
    %81 = vector.shape_cast %80 : vector<1x8x256xf32> to vector<8x256xf32>
    %cst_34 = arith.constant 9.99999993E-9 : f32
    %82 = vector.broadcast %cst_34 : f32 to vector<8x256xf32>
    %83 = arith.addf %81, %82 : vector<8x256xf32>
    %84 = tpu.reciprocal %83 {approx = true} : vector<8x256xf32> -> vector<8x256xf32>
    %cst_35 = arith.constant 9.99999993E-9 : f32
    %85 = vector.broadcast %cst_35 : f32 to vector<8x256xf32>
    %86 = arith.addf %81, %85 : vector<8x256xf32>
    %87 = math.log %86 : vector<8x256xf32>
    %c255_i32_36 = arith.constant 255 : i32
    %88 = tpu.dynamic_rotate %76 by %c255_i32_36 dim 1 : vector<8x256xf32>, i32 -> vector<8x256xf32>
    %c1_i32_37 = arith.constant 1 : i32
    %89 = tpu.dynamic_rotate %76 by %c1_i32_37 dim 1 : vector<8x256xf32>, i32 -> vector<8x256xf32>
    %90 = arith.mulf %6, %88 : vector<8x256xf32>
    %91 = arith.mulf %9, %76 : vector<8x256xf32>
    %92 = arith.addf %90, %91 : vector<8x256xf32>
    %93 = arith.mulf %12, %89 : vector<8x256xf32>
    %94 = arith.addf %92, %93 : vector<8x256xf32>
    %c240_i32_38 = arith.constant 240 : i32
    %95 = tpu.dynamic_rotate %79 by %c240_i32_38 dim 1 : vector<8x256xf32>, i32 -> vector<8x256xf32>
    %c16_i32_39 = arith.constant 16 : i32
    %96 = tpu.dynamic_rotate %79 by %c16_i32_39 dim 1 : vector<8x256xf32>, i32 -> vector<8x256xf32>
    %97 = arith.mulf %15, %95 : vector<8x256xf32>
    %98 = arith.mulf %18, %79 : vector<8x256xf32>
    %99 = arith.addf %97, %98 : vector<8x256xf32>
    %100 = arith.mulf %21, %96 : vector<8x256xf32>
    %101 = arith.addf %99, %100 : vector<8x256xf32>
    %102 = arith.addf %94, %101 : vector<8x256xf32>
    %c255_i32_40 = arith.constant 255 : i32
    %103 = tpu.dynamic_rotate %87 by %c255_i32_40 dim 1 : vector<8x256xf32>, i32 -> vector<8x256xf32>
    %c1_i32_41 = arith.constant 1 : i32
    %104 = tpu.dynamic_rotate %87 by %c1_i32_41 dim 1 : vector<8x256xf32>, i32 -> vector<8x256xf32>
    %105 = arith.mulf %6, %103 : vector<8x256xf32>
    %106 = arith.mulf %9, %87 : vector<8x256xf32>
    %107 = arith.addf %105, %106 : vector<8x256xf32>
    %108 = arith.mulf %12, %104 : vector<8x256xf32>
    %109 = arith.addf %107, %108 : vector<8x256xf32>
    %110 = arith.mulf %76, %109 : vector<8x256xf32>
    %111 = arith.addf %102, %110 : vector<8x256xf32>
    %c240_i32_42 = arith.constant 240 : i32
    %112 = tpu.dynamic_rotate %87 by %c240_i32_42 dim 1 : vector<8x256xf32>, i32 -> vector<8x256xf32>
    %c16_i32_43 = arith.constant 16 : i32
    %113 = tpu.dynamic_rotate %87 by %c16_i32_43 dim 1 : vector<8x256xf32>, i32 -> vector<8x256xf32>
    %114 = arith.mulf %15, %112 : vector<8x256xf32>
    %115 = arith.mulf %18, %87 : vector<8x256xf32>
    %116 = arith.addf %114, %115 : vector<8x256xf32>
    %117 = arith.mulf %21, %113 : vector<8x256xf32>
    %118 = arith.addf %116, %117 : vector<8x256xf32>
    %119 = arith.mulf %79, %118 : vector<8x256xf32>
    %120 = arith.addf %111, %119 : vector<8x256xf32>
    %121 = arith.mulf %120, %84 : vector<8x256xf32>
    %c0_44 = arith.constant 0 : index
    %c0_45 = arith.constant 0 : index
    %c0_46 = arith.constant 0 : index
    %122 = vector.load %arg9[%c0_44, %c0_45, %c0_46] : memref<1x8x256xf32, #tpu.memory_space<vmem>>, vector<1x8x256xf32>
    %123 = vector.shape_cast %122 : vector<1x8x256xf32> to vector<8x256xf32>
    %124 = arith.addf %123, %121 : vector<8x256xf32>
    %125 = arith.subf %73, %124 : vector<8x256xf32>
    %c0_47 = arith.constant 0 : index
    %c0_48 = arith.constant 0 : index
    %126 = vector.load %arg13[%c0_47, %c0_48] : memref<8x256xf32, #tpu.memory_space<vmem>>, vector<8x256xf32>
    %127 = arith.mulf %125, %125 : vector<8x256xf32>
    %128 = arith.addf %126, %127 : vector<8x256xf32>
    %c0_49 = arith.constant 0 : index
    %c0_50 = arith.constant 0 : index
    %129 = vector.load %arg13[%c0_49, %c0_50] : memref<8x256xf32, #tpu.memory_space<vmem>>, vector<8x256xf32>
    tpu.vector_store %arg13[%c0_49, %c0_50], %128 {strides = array<i32>} : memref<8x256xf32, #tpu.memory_space<vmem>>, vector<8x256xf32>,
    %c1_i32_51 = arith.constant 1 : i32
    %130 = arith.cmpi eq, %arg1, %c1_i32_51 : i32
    %131 = arith.extui %130 : i1 to i32
    %c0_i32_52 = arith.constant 0 : i32
    %132 = arith.cmpi ne, %131, %c0_i32_52 : i32
    scf.if %132 {
      %c0_53 = arith.constant 0 : index
      %c0_54 = arith.constant 0 : index
      %133 = vector.load %arg13[%c0_53, %c0_54] : memref<8x256xf32, #tpu.memory_space<vmem>>, vector<8x256xf32>
      %134 = vector.shape_cast %133 : vector<8x256xf32> to vector<1x8x256xf32>
      %cst_55 = arith.constant dense<0.000000e+00> : vector<1xf32>
      %135 = vector.multi_reduction <add>, %134, %cst_55 [1, 2] : vector<1x8x256xf32> to vector<1xf32>
      %136 = vector.shape_cast %135 : vector<1xf32> to vector<1x1x1xf32>
      %137 = vector.extract %136[0, 0, 0] : f32 from vector<1x1x1xf32>
      %138 = vector.broadcast %137 : f32 to vector<8x128xf32>
      %c0_56 = arith.constant 0 : index
      %c0_57 = arith.constant 0 : index
      %c0_58 = arith.constant 0 : index
      %139 = vector.load %arg12[%c0_56, %c0_57, %c0_58] : memref<1x8x128xf32, #tpu.memory_space<vmem>>, vector<1x8x128xf32>
      %140 = vector.shape_cast %139 : vector<1x8x128xf32> to vector<8x128xf32>
      %141 = vector.shape_cast %138 : vector<8x128xf32> to vector<1x8x128xf32>
      tpu.vector_store %arg12[%c0_56, %c0_57, %c0_58], %141 {strides = array<i32>} : memref<1x8x128xf32, #tpu.memory_space<vmem>>, vector<1x8x128xf32>,
    } else {
    }
    return
  }
  func.func @transform_0(%arg0: i32, %arg1: i32) -> (i32, i32, i32) {
    %c0_i32 = arith.constant 0 : i32
    %c0_i32_0 = arith.constant 0 : i32
    return %arg0, %arg1, %c0_i32 : i32, i32, i32
  }
  func.func @transform_1(%arg0: i32, %arg1: i32) -> (i32, i32, i32) {
    %c0_i32 = arith.constant 0 : i32
    %c0_i32_0 = arith.constant 0 : i32
    return %arg0, %arg1, %c0_i32 : i32, i32, i32
  }
  func.func @transform_2(%arg0: i32, %arg1: i32) -> (i32, i32, i32) {
    %c0_i32 = arith.constant 0 : i32
    %c0_i32_0 = arith.constant 0 : i32
    return %arg0, %arg1, %c0_i32 : i32, i32, i32
  }
  func.func @transform_3(%arg0: i32, %arg1: i32) -> (i32, i32, i32) {
    %c0_i32 = arith.constant 0 : i32
    %c0_i32_0 = arith.constant 0 : i32
    return %arg0, %arg1, %c0_i32 : i32, i32, i32
  }
  func.func @transform_4(%arg0: i32, %arg1: i32) -> (i32, i32, i32) {
    %c0_i32 = arith.constant 0 : i32
    %c0_i32_0 = arith.constant 0 : i32
    return %arg0, %arg1, %c0_i32 : i32, i32, i32
  }
  func.func @transform_5(%arg0: i32, %arg1: i32) -> (i32, i32, i32) {
    %c0_i32 = arith.constant 0 : i32
    %c0_i32_0 = arith.constant 0 : i32
    return %arg0, %arg1, %c0_i32 : i32, i32, i32
  }
  func.func @transform_6(%arg0: i32, %arg1: i32) -> (i32, i32, i32) {
    %c0_i32 = arith.constant 0 : i32
    %c0_i32_0 = arith.constant 0 : i32
    return %arg0, %arg1, %c0_i32 : i32, i32, i32
  }
  func.func @transform_7(%arg0: i32, %arg1: i32) -> (i32, i32, i32) {
    %c0_i32 = arith.constant 0 : i32
    %c0_i32_0 = arith.constant 0 : i32
    return %arg0, %arg1, %c0_i32 : i32, i32, i32
  }
  func.func @transform_8(%arg0: i32, %arg1: i32) -> (i32, i32) {
    %c0_i32 = arith.constant 0 : i32
    %c0_i32_0 = arith.constant 0 : i32
    %c0_i32_1 = arith.constant 0 : i32
    return %c0_i32, %c0_i32_0 : i32, i32
  }
  func.func @transform_9(%arg0: i32, %arg1: i32) -> (i32, i32) {
    %c0_i32 = arith.constant 0 : i32
    %c0_i32_0 = arith.constant 0 : i32
    %c0_i32_1 = arith.constant 0 : i32
    return %c0_i32, %c0_i32_0 : i32, i32
  }
  func.func @transform_10(%arg0: i32, %arg1: i32) -> (i32, i32, i32) {
    %c0_i32 = arith.constant 0 : i32
    %c0_i32_0 = arith.constant 0 : i32
    %c0_i32_1 = arith.constant 0 : i32
    return %arg0, %c0_i32, %c0_i32_0 : i32, i32, i32
  }
}

</mosaic_0001>

<llo_original>
// kernel: tpu_custom_call.1
$region0: #{tpu_custom_call.1}
  #allocation0 [shape = 'u32[]', space=smem, size = 0x4, offset = 0x4, fixed_abs, tag = 'smem constant byte address 0x4 - core index']
  #allocation1 [shape = 'u32[144,128]{1,0:T(1,128)}', space=vmem, size = 0x12000, scoped, tag = 'internal scratch']
  #allocation2 [shape = 'f32[8,256]{1,0:T(8,128)}', space=vmem, size = 0x2000, scoped, tag = 'scratch operand']
  %s0 = inlined_call_operand.hbm [shape: f32[2,64,256], index: 0, kind: input, shape index: {}]
  %s1 = inlined_call_operand.hbm [shape: f32[2,64,256], index: 1, kind: input, shape index: {}]
  %s2 = inlined_call_operand.hbm [shape: f32[2,16,256], index: 2, kind: input, shape index: {}]
  %s3 = inlined_call_operand.hbm [shape: f32[2,16,256], index: 3, kind: input, shape index: {}]
  %s4 = inlined_call_operand.hbm [shape: f32[2,64,256], index: 4, kind: input, shape index: {}]
  %s5 = inlined_call_operand.hbm [shape: f32[2,64,256], index: 5, kind: input, shape index: {}]
  %s6 = inlined_call_operand.hbm [shape: f32[2,16,256], index: 6, kind: input, shape index: {}]
  %s7 = inlined_call_operand.hbm [shape: f32[2,16,256], index: 7, kind: input, shape index: {}]
  %s8 = inlined_call_operand.vmem [shape: f32[8,32], index: 8, kind: input, shape index: {}]
  %s9 = inlined_call_operand.vmem [shape: f32[6,256], index: 9, kind: input, shape index: {}]
  %s10 = inlined_call_operand.hbm [shape: f32[2,8,128], index: 10, kind: output, shape index: {}]
  %s11 = sld [smem:[#allocation0]]
  $region113: #{tpu_custom_call.1} parent=0
    _
  %s13 = ssub.s32 1, %s11
  %s14 = scalar_select 0, %s13, %s11
  $region1: #{tpu_custom_call.1} parent=0
    #allocation3 [shape = 'u8[65536]{0}', space=vmem, size = 0x10000, scoped, tag = 'input window, operand 0']
    #allocation4 [shape = 's32[2]{0}', space=sflag, size = 0x8, scoped, tag = 'scoped memory for tpu_custom_call.1']
    #allocation5 [shape = 's32[2]{0}', space=sflag, size = 0x8, scoped, tag = 'scoped memory for tpu_custom_call.1']
    #allocation6 [shape = 'u8[65536]{0}', space=vmem, size = 0x10000, scoped, tag = 'input window, operand 1']
    #allocation7 [shape = 's32[2]{0}', space=sflag, size = 0x8, scoped, tag = 'scoped memory for tpu_custom_call.1']
    #allocation8 [shape = 'u8[16384]{0}', space=vmem, size = 0x4000, scoped, tag = 'input window, operand 2']
    #allocation9 [shape = 'u8[16384]{0}', space=vmem, size = 0x4000, scoped, tag = 'input window, operand 3']
    #allocation10 [shape = 's32[2]{0}', space=sflag, size = 0x8, scoped, tag = 'scoped memory for tpu_custom_call.1']
    #allocation11 [shape = 'u8[65536]{0}', space=vmem, size = 0x10000, scoped, tag = 'input window, operand 4']
    #allocation12 [shape = 'u8[65536]{0}', space=vmem, size = 0x10000, scoped, tag = 'input window, operand 5']
    #allocation13 [shape = 's32[2]{0}', space=sflag, size = 0x8, scoped, tag = 'scoped memory for tpu_custom_call.1']
    #allocation14 [shape = 'u8[16384]{0}', space=vmem, size = 0x4000, scoped, tag = 'input window, operand 6']
    #allocation15 [shape = 'u8[16384]{0}', space=vmem, size = 0x4000, scoped, tag = 'input window, operand 7']
    #allocation16 [shape = 's32[2]{0}', space=sflag, size = 0x8, scoped, tag = 'scoped memory for tpu_custom_call.1']
    #allocation17 [shape = 'u8[8192]{0}', space=vmem, size = 0x2000, scoped, tag = 'output window, operand 0']
    %15 = vsyncpa [#allocation4], 0
    %s16 = scalar_lea.sflag [#allocation4], 1
    %17 = vsyncpa %s16, 0
    %18 = vsyncpa [#allocation7], 0
    %s19 = scalar_lea.sflag [#allocation7], 1
    %20 = vsyncpa %s19, 0
    %21 = vsyncpa [#allocation10], 0
    %s22 = scalar_lea.sflag [#allocation10], 1
    %23 = vsyncpa %s22, 0
    %24 = vsyncpa [#allocation13], 0
    %s25 = scalar_lea.sflag [#allocation13], 1
    %26 = vsyncpa %s25, 0
    %27 = vsyncpa [#allocation16], 0
    %s28 = scalar_lea.sflag [#allocation16], 1
    %29 = vsyncpa %s28, 0
    %30 = vsyncpa [#allocation5], 0
    %s31 = scalar_lea.sflag [#allocation5], 1
    %32 = vsyncpa %s31, 0
    loop: start=0, step=1, limit=6
    $region2: #{tpu_custom_call.1} parent=1 // loop_pre_header
      _
    $region3: #{tpu_custom_call.1} parent=1 // loop_header
      %s34 = sphi 0, %s38
      %p35 = scmp.ge.s32.totalorder %s34, 6
      %s41 = sphi 0, %s53
      %s42 = sphi 0, %s49
      %s43 = sphi 0, %s41
      %s44 = sphi 0, %s42
      %s45 = sphi 0, %s43
      %s46 = sphi 0, %s44
      %s58 = sphi 0, %s60
      %s61 = sphi 0, %s58
      %s62 = sphi 0, %s61
      %s78 = sphi 0, %s62
      %s86 = sphi 0, %s88
      %s89 = sphi 0, %s86
      %s90 = sphi 0, %s89
      %s106 = sphi 0, %s90
      %s114 = sphi 0, %s116
      %s117 = sphi 0, %s114
      %s118 = sphi 0, %s117
      %s134 = sphi 0, %s118
      %s142 = sphi 0, %s144
      %s145 = sphi 0, %s142
      %s146 = sphi 0, %s145
      %s162 = sphi 0, %s146
      %s170 = sphi 0, %s172
      %s173 = sphi 0, %s170
      %s174 = sphi 0, %s173
      %s190 = sphi 0, %s174
      %s198 = sphi 0, %s200
      %s201 = sphi 0, %s198
      %s202 = sphi 0, %s201
      %s218 = sphi 0, %s202
      %s226 = sphi 0, %s228
      %s229 = sphi 0, %s226
      %s230 = sphi 0, %s229
      %s246 = sphi 0, %s230
      %s254 = sphi 0, %s256
      %s257 = sphi 0, %s254
      %s258 = sphi 0, %s257
      %s274 = sphi 0, %s258
      %s278 = sphi 0, %s278
      %s280 = sphi 0, %s278
      %s281 = sphi 0, %s280
      %s295 = sphi 0, %s281
      %s299 = sphi 0, %s299
      %s301 = sphi 0, %s299
      %s302 = sphi 0, %s301
      %s316 = sphi 0, %s302
      %s322 = sphi 0, %s324
      %s325 = sphi 0, %s322
      %s326 = sphi 0, %s325
      %s342 = sphi 0, %s326
    $region4: #{tpu_custom_call.1} parent=1 // loop_header_branch
      %37 = sbr.rel (%p35) target = $region8
    $region5: #{tpu_custom_call.1} parent=1 // loop_body
      %s39 = ssub.s32 %s34, 1
      %s40 = ssub.s32 %s34, 2
      %s47 = sadd.s32 1, %s42
      %p48 = scmp.ge.s32.totalorder %s47, 2
      %s49 = scalar_select %p48, 0, %s47
      %s50 = sadd.s32 1, %s41
      %s51 = scalar_select %p48, %s50, %s41
      %p52 = scmp.ge.s32.totalorder %s51, 2
      %s53 = scalar_select %p52, 0, %s51
      %s54 = ssub.s32 %s41, %s53
      %s55 = ssub.s32 %s42, %s49
      %s56 = sor.u32 %s54, %s55
      %p57 = scmp.eq.s32.totalorder %s56, 0
      %s59 = sadd.s32 %s58, 1
      %s60 = scalar_select %p57, %s58, %s59
      %p63 = pneg %p57
      %p64 = scmp.eq.s32.totalorder %s34, 3
      %p65 = por %p63, %p64
      %p66 = scmp.ne.s32.totalorder %s58, %s61
      %p67 = scmp.eq.s32.totalorder %s34, 0
      %p68 = por %p66, %p67
      %p69 = scmp.ne.s32.totalorder %s58, %s61
      %p70 = scmp.eq.s32.totalorder %s39, 3
      %p71 = por %p69, %p70
      %p72 = scmp.ne.s32.totalorder %s61, %s62
      %p73 = scmp.eq.s32.totalorder %s39, 0
      %p74 = por %p72, %p73
      %p75 = scmp.ne.s32.totalorder %s61, %s62
      %p76 = scmp.eq.s32.totalorder %s40, 3
      %p77 = por %p75, %p76
      %p79 = scmp.ne.s32.totalorder %s62, %s78
      %p80 = scmp.eq.s32.totalorder %s40, 0
      %p81 = por %p79, %p80
      %s82 = ssub.s32 %s41, %s53
      %s83 = ssub.s32 %s42, %s49
      %s84 = sor.u32 %s82, %s83
      %p85 = scmp.eq.s32.totalorder %s84, 0
      %s87 = sadd.s32 %s86, 1
      %s88 = scalar_select %p85, %s86, %s87
      %p91 = pneg %p85
      %p92 = scmp.eq.s32.totalorder %s34, 3
      %p93 = por %p91, %p92
      %p94 = scmp.ne.s32.totalorder %s86, %s89
      %p95 = scmp.eq.s32.totalorder %s34, 0
      %p96 = por %p94, %p95
      %p97 = scmp.ne.s32.totalorder %s86, %s89
      %p98 = scmp.eq.s32.totalorder %s39, 3
      %p99 = por %p97, %p98
      %p100 = scmp.ne.s32.totalorder %s89, %s90
      %p101 = scmp.eq.s32.totalorder %s39, 0
      %p102 = por %p100, %p101
      %p103 = scmp.ne.s32.totalorder %s89, %s90
      %p104 = scmp.eq.s32.totalorder %s40, 3
      %p105 = por %p103, %p104
      %p107 = scmp.ne.s32.totalorder %s90, %s106
      %p108 = scmp.eq.s32.totalorder %s40, 0
      %p109 = por %p107, %p108
      %s110 = ssub.s32 %s41, %s53
      %s111 = ssub.s32 %s42, %s49
      %s112 = sor.u32 %s110, %s111
      %p113 = scmp.eq.s32.totalorder %s112, 0
      %s115 = sadd.s32 %s114, 1
      %s116 = scalar_select %p113, %s114, %s115
      %p119 = pneg %p113
      %p120 = scmp.eq.s32.totalorder %s34, 3
      %p121 = por %p119, %p120
      %p122 = scmp.ne.s32.totalorder %s114, %s117
      %p123 = scmp.eq.s32.totalorder %s34, 0
      %p124 = por %p122, %p123
      %p125 = scmp.ne.s32.totalorder %s114, %s117
      %p126 = scmp.eq.s32.totalorder %s39, 3
      %p127 = por %p125, %p126
      %p128 = scmp.ne.s32.totalorder %s117, %s118
      %p129 = scmp.eq.s32.totalorder %s39, 0
      %p130 = por %p128, %p129
      %p131 = scmp.ne.s32.totalorder %s117, %s118
      %p132 = scmp.eq.s32.totalorder %s40, 3
      %p133 = por %p131, %p132
      %p135 = scmp.ne.s32.totalorder %s118, %s134
      %p136 = scmp.eq.s32.totalorder %s40, 0
      %p137 = por %p135, %p136
      %s138 = ssub.s32 %s41, %s53
      %s139 = ssub.s32 %s42, %s49
      %s140 = sor.u32 %s138, %s139
      %p141 = scmp.eq.s32.totalorder %s140, 0
      %s143 = sadd.s32 %s142, 1
      %s144 = scalar_select %p141, %s142, %s143
      %p147 = pneg %p141
      %p148 = scmp.eq.s32.totalorder %s34, 3
      %p149 = por %p147, %p148
      %p150 = scmp.ne.s32.totalorder %s142, %s145
      %p151 = scmp.eq.s32.totalorder %s34, 0
      %p152 = por %p150, %p151
      %p153 = scmp.ne.s32.totalorder %s142, %s145
      %p154 = scmp.eq.s32.totalorder %s39, 3
      %p155 = por %p153, %p154
      %p156 = scmp.ne.s32.totalorder %s145, %s146
      %p157 = scmp.eq.s32.totalorder %s39, 0
      %p158 = por %p156, %p157
      %p159 = scmp.ne.s32.totalorder %s145, %s146
      %p160 = scmp.eq.s32.totalorder %s40, 3
      %p161 = por %p159, %p160
      %p163 = scmp.ne.s32.totalorder %s146, %s162
      %p164 = scmp.eq.s32.totalorder %s40, 0
      %p165 = por %p163, %p164
      %s166 = ssub.s32 %s41, %s53
      %s167 = ssub.s32 %s42, %s49
      %s168 = sor.u32 %s166, %s167
      %p169 = scmp.eq.s32.totalorder %s168, 0
      %s171 = sadd.s32 %s170, 1
      %s172 = scalar_select %p169, %s170, %s171
      %p175 = pneg %p169
      %p176 = scmp.eq.s32.totalorder %s34, 3
      %p177 = por %p175, %p176
      %p178 = scmp.ne.s32.totalorder %s170, %s173
      %p179 = scmp.eq.s32.totalorder %s34, 0
      %p180 = por %p178, %p179
      %p181 = scmp.ne.s32.totalorder %s170, %s173
      %p182 = scmp.eq.s32.totalorder %s39, 3
      %p183 = por %p181, %p182
      %p184 = scmp.ne.s32.totalorder %s173, %s174
      %p185 = scmp.eq.s32.totalorder %s39, 0
      %p186 = por %p184, %p185
      %p187 = scmp.ne.s32.totalorder %s173, %s174
      %p188 = scmp.eq.s32.totalorder %s40, 3
      %p189 = por %p187, %p188
      %p191 = scmp.ne.s32.totalorder %s174, %s190
      %p192 = scmp.eq.s32.totalorder %s40, 0
      %p193 = por %p191, %p192
      %s194 = ssub.s32 %s41, %s53
      %s195 = ssub.s32 %s42, %s49
      %s196 = sor.u32 %s194, %s195
      %p197 = scmp.eq.s32.totalorder %s196, 0
      %s199 = sadd.s32 %s198, 1
      %s200 = scalar_select %p197, %s198, %s199
      %p203 = pneg %p197
      %p204 = scmp.eq.s32.totalorder %s34, 3
      %p205 = por %p203, %p204
      %p206 = scmp.ne.s32.totalorder %s198, %s201
      %p207 = scmp.eq.s32.totalorder %s34, 0
      %p208 = por %p206, %p207
      %p209 = scmp.ne.s32.totalorder %s198, %s201
      %p210 = scmp.eq.s32.totalorder %s39, 3
      %p211 = por %p209, %p210
      %p212 = scmp.ne.s32.totalorder %s201, %s202
      %p213 = scmp.eq.s32.totalorder %s39, 0
      %p214 = por %p212, %p213
      %p215 = scmp.ne.s32.totalorder %s201, %s202
      %p216 = scmp.eq.s32.totalorder %s40, 3
      %p217 = por %p215, %p216
      %p219 = scmp.ne.s32.totalorder %s202, %s218
      %p220 = scmp.eq.s32.totalorder %s40, 0
      %p221 = por %p219, %p220
      %s222 = ssub.s32 %s41, %s53
      %s223 = ssub.s32 %s42, %s49
      %s224 = sor.u32 %s222, %s223
      %p225 = scmp.eq.s32.totalorder %s224, 0
      %s227 = sadd.s32 %s226, 1
      %s228 = scalar_select %p225, %s226, %s227
      %p231 = pneg %p225
      %p232 = scmp.eq.s32.totalorder %s34, 3
      %p233 = por %p231, %p232
      %p234 = scmp.ne.s32.totalorder %s226, %s229
      %p235 = scmp.eq.s32.totalorder %s34, 0
      %p236 = por %p234, %p235
      %p237 = scmp.ne.s32.totalorder %s226, %s229
      %p238 = scmp.eq.s32.totalorder %s39, 3
      %p239 = por %p237, %p238
      %p240 = scmp.ne.s32.totalorder %s229, %s230
      %p241 = scmp.eq.s32.totalorder %s39, 0
      %p242 = por %p240, %p241
      %p243 = scmp.ne.s32.totalorder %s229, %s230
      %p244 = scmp.eq.s32.totalorder %s40, 3
      %p245 = por %p243, %p244
      %p247 = scmp.ne.s32.totalorder %s230, %s246
      %p248 = scmp.eq.s32.totalorder %s40, 0
      %p249 = por %p247, %p248
      %s250 = ssub.s32 %s41, %s53
      %s251 = ssub.s32 %s42, %s49
      %s252 = sor.u32 %s250, %s251
      %p253 = scmp.eq.s32.totalorder %s252, 0
      %s255 = sadd.s32 %s254, 1
      %s256 = scalar_select %p253, %s254, %s255
      %p259 = pneg %p253
      %p260 = scmp.eq.s32.totalorder %s34, 3
      %p261 = por %p259, %p260
      %p262 = scmp.ne.s32.totalorder %s254, %s257
      %p263 = scmp.eq.s32.totalorder %s34, 0
      %p264 = por %p262, %p263
      %p265 = scmp.ne.s32.totalorder %s254, %s257
      %p266 = scmp.eq.s32.totalorder %s39, 3
      %p267 = por %p265, %p266
      %p268 = scmp.ne.s32.totalorder %s257, %s258
      %p269 = scmp.eq.s32.totalorder %s39, 0
      %p270 = por %p268, %p269
      %p271 = scmp.ne.s32.totalorder %s257, %s258
      %p272 = scmp.eq.s32.totalorder %s40, 3
      %p273 = por %p271, %p272
      %p275 = scmp.ne.s32.totalorder %s258, %s274
      %p276 = scmp.eq.s32.totalorder %s40, 0
      %p277 = por %p275, %p276
      %s279 = sadd.s32 %s278, 1
      %p282 = scmp.eq.s32.totalorder %s34, 3
      %p283 = scmp.ne.s32.totalorder %s278, %s280
      %p284 = scmp.eq.s32.totalorder %s34, 0
      %p285 = por %p283, %p284
      %p286 = scmp.ne.s32.totalorder %s278, %s280
      %p287 = scmp.eq.s32.totalorder %s39, 3
      %p288 = por %p286, %p287
      %p289 = scmp.ne.s32.totalorder %s280, %s281
      %p290 = scmp.eq.s32.totalorder %s39, 0
      %p291 = por %p289, %p290
      %p292 = scmp.ne.s32.totalorder %s280, %s281
      %p293 = scmp.eq.s32.totalorder %s40, 3
      %p294 = por %p292, %p293
      %p296 = scmp.ne.s32.totalorder %s281, %s295
      %p297 = scmp.eq.s32.totalorder %s40, 0
      %p298 = por %p296, %p297
      %s300 = sadd.s32 %s299, 1
      %p303 = scmp.eq.s32.totalorder %s34, 3
      %p304 = scmp.ne.s32.totalorder %s299, %s301
      %p305 = scmp.eq.s32.totalorder %s34, 0
      %p306 = por %p304, %p305
      %p307 = scmp.ne.s32.totalorder %s299, %s301
      %p308 = scmp.eq.s32.totalorder %s39, 3
      %p309 = por %p307, %p308
      %p310 = scmp.ne.s32.totalorder %s301, %s302
      %p311 = scmp.eq.s32.totalorder %s39, 0
      %p312 = por %p310, %p311
      %p313 = scmp.ne.s32.totalorder %s301, %s302
      %p314 = scmp.eq.s32.totalorder %s40, 3
      %p315 = por %p313, %p314
      %p317 = scmp.ne.s32.totalorder %s302, %s316
      %p318 = scmp.eq.s32.totalorder %s40, 0
      %p319 = por %p317, %p318
      %s320 = ssub.s32 %s41, %s53
      %p321 = scmp.eq.s32.totalorder %s320, 0
      %s323 = sadd.s32 %s322, 1
      %s324 = scalar_select %p321, %s322, %s323
      %p327 = pneg %p321
      %p328 = scmp.eq.s32.totalorder %s34, 3
      %p329 = por %p327, %p328
      %p330 = scmp.ne.s32.totalorder %s322, %s325
      %p331 = scmp.eq.s32.totalorder %s34, 0
      %p332 = por %p330, %p331
      %p333 = scmp.ne.s32.totalorder %s322, %s325
      %p334 = scmp.eq.s32.totalorder %s39, 3
      %p335 = por %p333, %p334
      %p336 = scmp.ne.s32.totalorder %s325, %s326
      %p337 = scmp.eq.s32.totalorder %s39, 0
      %p338 = por %p336, %p337
      %p339 = scmp.ne.s32.totalorder %s325, %s326
      %p340 = scmp.eq.s32.totalorder %s40, 3
      %p341 = por %p339, %p340
      %p343 = scmp.ne.s32.totalorder %s326, %s342
      %p344 = scmp.eq.s32.totalorder %s40, 0
      %p345 = por %p343, %p344
      %p346 = scmp.le.s32.totalorder 1, %s34
      %p347 = scmp.lt.s32.totalorder %s34, 5
      %p348 = pnand %p346, %p347
      %p349 = pneg %p348
      // Predicated region
      $region9: #{tpu_custom_call.1} parent=5 // pred_check
        _
      $region10: #{tpu_custom_call.1} parent=5 // pred_check_branch
        %351 = sbr.rel (%p348) target = $region12
      $region11: #{tpu_custom_call.1} parent=5 // pred_region
        %s352 = ssub.s32 %s34, 1
        // Predicated region
        $region13: #{tpu_custom_call.1} parent=11 // pred_check
          %p353 = pneg %p291
        $region14: #{tpu_custom_call.1} parent=11 // pred_check_branch
          %355 = sbr.rel (%p353) target = $region16
        $region15: #{tpu_custom_call.1} parent=11 // pred_region
          _
        $region16: #{tpu_custom_call.1} parent=11 // pred_fallthru
          _
        // Predicated region
        $region17: #{tpu_custom_call.1} parent=11 // pred_check
          %p356 = pneg %p312
        $region18: #{tpu_custom_call.1} parent=11 // pred_check_branch
          %358 = sbr.rel (%p356) target = $region20
        $region19: #{tpu_custom_call.1} parent=11 // pred_region
          _
        $region20: #{tpu_custom_call.1} parent=11 // pred_fallthru
          _
      $region12: #{tpu_custom_call.1} parent=5 // pred_fallthru
        _
      %p359 = scmp.lt.s32.totalorder %s34, 4
      // Predicated region
      $region21: #{tpu_custom_call.1} parent=5 // pred_check
        %p360 = pneg %p359
      $region22: #{tpu_custom_call.1} parent=5 // pred_check_branch
        %362 = sbr.rel (%p360) target = $region24
      $region23: #{tpu_custom_call.1} parent=5 // pred_region
        // Predicated region
        $region25: #{tpu_custom_call.1} parent=23 // pred_check
          %p363 = pneg %p68
        $region26: #{tpu_custom_call.1} parent=23 // pred_check_branch
          %365 = sbr.rel (%p363) target = $region28
        $region27: #{tpu_custom_call.1} parent=23 // pred_region
          %s366 = sand.u32 %s58, 1
          %s367 = scalar_lea.sflag [#allocation4], %s366
          %s368 = sand.u32 %s58, 1
          %s369 = smul.addr %s368, 64
          %s370 = scalar_lea.vmem [#allocation3], %s369
          %s371 = smul.u32 4, %s42
          %s373 = ssub.s32 1024, 1024
          %374 = vsyncadd %s367, %s373
          %s375 = smul.addr %s371, 2
          %s376 = smul.addr %s41, 16
          %s377 = sadd.s32 %s375, %s376
          %s378 = smul.addr %s377, 128
          %s379 = scalar_lea.hbm %s0, %s378
          %s380 = sshll.u32 %s370, 4
          %s381 = int_to_ptr.vmem [resolvable:$true] %s380
          %386 = dma.hbm_to_vmem [thread:$0]  %s379, 1024, %s381, %s367, 256, 256, 16
        $region28: #{tpu_custom_call.1} parent=23 // pred_fallthru
          _
        // Predicated region
        $region29: #{tpu_custom_call.1} parent=23 // pred_check
          %p387 = pneg %p96
        $region30: #{tpu_custom_call.1} parent=23 // pred_check_branch
          %389 = sbr.rel (%p387) target = $region32
        $region31: #{tpu_custom_call.1} parent=23 // pred_region
          %s390 = sand.u32 %s34, 1
          %s391 = scalar_lea.sflag [#allocation7], %s390
          %s392 = sand.u32 %s86, 1
          %s393 = smul.addr %s392, 64
          %s394 = scalar_lea.vmem [#allocation6], %s393
          %s395 = smul.u32 4, %s42
          %s397 = ssub.s32 1024, 1024
          %398 = vsyncadd %s391, %s397
          %s399 = smul.addr %s395, 2
          %s400 = smul.addr %s41, 16
          %s401 = sadd.s32 %s399, %s400
          %s402 = smul.addr %s401, 128
          %s403 = scalar_lea.hbm %s1, %s402
          %s404 = sshll.u32 %s394, 4
          %s405 = int_to_ptr.vmem [resolvable:$true] %s404
          %410 = dma.hbm_to_vmem [thread:$0]  %s403, 1024, %s405, %s391, 256, 256, 16
        $region32: #{tpu_custom_call.1} parent=23 // pred_fallthru
          _
        // Predicated region
        $region33: #{tpu_custom_call.1} parent=23 // pred_check
          %p411 = pneg %p124
        $region34: #{tpu_custom_call.1} parent=23 // pred_check_branch
          %413 = sbr.rel (%p411) target = $region36
        $region35: #{tpu_custom_call.1} parent=23 // pred_region
          %s414 = sand.u32 %s34, 1
          %s415 = scalar_lea.sflag [#allocation7], %s414
          %s416 = sand.u32 %s114, 1
          %s417 = smul.addr %s416, 16
          %s418 = scalar_lea.vmem [#allocation8], %s417
          %s420 = ssub.s32 256, 256
          %421 = vsyncadd %s415, %s420
          %s422 = smul.addr %s42, 2
          %s423 = smul.addr %s41, 4
          %s424 = sadd.s32 %s422, %s423
          %s425 = smul.addr %s424, 128
          %s426 = scalar_lea.hbm %s2, %s425
          %s428 = sshll.u32 %s418, 4
          %s429 = int_to_ptr.vmem [resolvable:$true] %s428
          %431 = dma.hbm_to_vmem [thread:$0]  %s426, 256, %s429, %s415
        $region36: #{tpu_custom_call.1} parent=23 // pred_fallthru
          _
        // Predicated region
        $region37: #{tpu_custom_call.1} parent=23 // pred_check
          %p432 = pneg %p152
        $region38: #{tpu_custom_call.1} parent=23 // pred_check_branch
          %434 = sbr.rel (%p432) target = $region40
        $region39: #{tpu_custom_call.1} parent=23 // pred_region
          %s435 = sand.u32 %s34, 1
          %s436 = scalar_lea.sflag [#allocation10], %s435
          %s437 = sand.u32 %s142, 1
          %s438 = smul.addr %s437, 16
          %s439 = scalar_lea.vmem [#allocation9], %s438
          %s441 = ssub.s32 256, 256
          %442 = vsyncadd %s436, %s441
          %s443 = smul.addr %s42, 2
          %s444 = smul.addr %s41, 4
          %s445 = sadd.s32 %s443, %s444
          %s446 = smul.addr %s445, 128
          %s447 = scalar_lea.hbm %s3, %s446
          %s449 = sshll.u32 %s439, 4
          %s450 = int_to_ptr.vmem [resolvable:$true] %s449
          %452 = dma.hbm_to_vmem [thread:$0]  %s447, 256, %s450, %s436
        $region40: #{tpu_custom_call.1} parent=23 // pred_fallthru
          _
        // Predicated region
        $region41: #{tpu_custom_call.1} parent=23 // pred_check
          %p453 = pneg %p180
        $region42: #{tpu_custom_call.1} parent=23 // pred_check_branch
          %455 = sbr.rel (%p453) target = $region44
        $region43: #{tpu_custom_call.1} parent=23 // pred_region
          %s456 = sand.u32 %s34, 1
          %s457 = scalar_lea.sflag [#allocation10], %s456
          %s458 = sand.u32 %s170, 1
          %s459 = smul.addr %s458, 64
          %s460 = scalar_lea.vmem [#allocation11], %s459
          %s461 = smul.u32 4, %s42
          %s463 = ssub.s32 1024, 1024
          %464 = vsyncadd %s457, %s463
          %s465 = smul.addr %s461, 2
          %s466 = smul.addr %s41, 16
          %s467 = sadd.s32 %s465, %s466
          %s468 = smul.addr %s467, 128
          %s469 = scalar_lea.hbm %s4, %s468
          %s470 = sshll.u32 %s460, 4
          %s471 = int_to_ptr.vmem [resolvable:$true] %s470
          %476 = dma.hbm_to_vmem [thread:$0]  %s469, 1024, %s471, %s457, 256, 256, 16
        $region44: #{tpu_custom_call.1} parent=23 // pred_fallthru
          _
        // Predicated region
        $region45: #{tpu_custom_call.1} parent=23 // pred_check
          %p477 = pneg %p208
        $region46: #{tpu_custom_call.1} parent=23 // pred_check_branch
          %479 = sbr.rel (%p477) target = $region48
        $region47: #{tpu_custom_call.1} parent=23 // pred_region
          %s480 = sand.u32 %s34, 1
          %s481 = scalar_lea.sflag [#allocation13], %s480
          %s482 = sand.u32 %s198, 1
          %s483 = smul.addr %s482, 64
          %s484 = scalar_lea.vmem [#allocation12], %s483
          %s485 = smul.u32 4, %s42
          %s487 = ssub.s32 1024, 1024
          %488 = vsyncadd %s481, %s487
          %s489 = smul.addr %s485, 2
          %s490 = smul.addr %s41, 16
          %s491 = sadd.s32 %s489, %s490
          %s492 = smul.addr %s491, 128
          %s493 = scalar_lea.hbm %s5, %s492
          %s494 = sshll.u32 %s484, 4
          %s495 = int_to_ptr.vmem [resolvable:$true] %s494
          %500 = dma.hbm_to_vmem [thread:$0]  %s493, 1024, %s495, %s481, 256, 256, 16
        $region48: #{tpu_custom_call.1} parent=23 // pred_fallthru
          _
        // Predicated region
        $region49: #{tpu_custom_call.1} parent=23 // pred_check
          %p501 = pneg %p236
        $region50: #{tpu_custom_call.1} parent=23 // pred_check_branch
          %503 = sbr.rel (%p501) target = $region52
        $region51: #{tpu_custom_call.1} parent=23 // pred_region
          %s504 = sand.u32 %s34, 1
          %s505 = scalar_lea.sflag [#allocation13], %s504
          %s506 = sand.u32 %s226, 1
          %s507 = smul.addr %s506, 16
          %s508 = scalar_lea.vmem [#allocation14], %s507
          %s510 = ssub.s32 256, 256
          %511 = vsyncadd %s505, %s510
          %s512 = smul.addr %s42, 2
          %s513 = smul.addr %s41, 4
          %s514 = sadd.s32 %s512, %s513
          %s515 = smul.addr %s514, 128
          %s516 = scalar_lea.hbm %s6, %s515
          %s518 = sshll.u32 %s508, 4
          %s519 = int_to_ptr.vmem [resolvable:$true] %s518
          %521 = dma.hbm_to_vmem [thread:$0]  %s516, 256, %s519, %s505
        $region52: #{tpu_custom_call.1} parent=23 // pred_fallthru
          _
        // Predicated region
        $region53: #{tpu_custom_call.1} parent=23 // pred_check
          %p522 = pneg %p264
        $region54: #{tpu_custom_call.1} parent=23 // pred_check_branch
          %524 = sbr.rel (%p522) target = $region56
        $region55: #{tpu_custom_call.1} parent=23 // pred_region
          %s525 = sand.u32 %s254, 1
          %s526 = scalar_lea.sflag [#allocation16], %s525
          %s527 = sand.u32 %s254, 1
          %s528 = smul.addr %s527, 16
          %s529 = scalar_lea.vmem [#allocation15], %s528
          %s531 = ssub.s32 256, 256
          %532 = vsyncadd %s526, %s531
          %s533 = smul.addr %s42, 2
          %s534 = smul.addr %s41, 4
          %s535 = sadd.s32 %s533, %s534
          %s536 = smul.addr %s535, 128
          %s537 = scalar_lea.hbm %s7, %s536
          %s539 = sshll.u32 %s529, 4
          %s540 = int_to_ptr.vmem [resolvable:$true] %s539
          %542 = dma.hbm_to_vmem [thread:$0]  %s537, 256, %s540, %s526
        $region56: #{tpu_custom_call.1} parent=23 // pred_fallthru
          _
      $region24: #{tpu_custom_call.1} parent=5 // pred_fallthru
        _
      %p543 = scmp.le.s32.totalorder 1, %s34
      %p544 = scmp.lt.s32.totalorder %s34, 5
      %p545 = pnand %p543, %p544
      %p546 = pneg %p545
      // Predicated region
      $region57: #{tpu_custom_call.1} parent=5 // pred_check
        _
      $region58: #{tpu_custom_call.1} parent=5 // pred_check_branch
        %548 = sbr.rel (%p545) target = $region60
      $region59: #{tpu_custom_call.1} parent=5 // pred_region
        %s549 = ssub.s32 %s34, 1
        %s550 = sand.u32 %s61, 1
        %s551 = scalar_lea.sflag [#allocation4], %s550
        %s552 = sand.u32 %s61, 1
        %s553 = smul.addr %s552, 64
        %s554 = scalar_lea.vmem [#allocation3], %s553
        // Predicated region
        $region61: #{tpu_custom_call.1} parent=59 // pred_check
          %p555 = pneg %p74
        $region62: #{tpu_custom_call.1} parent=59 // pred_check_branch
          %557 = sbr.rel (%p555) target = $region64
        $region63: #{tpu_custom_call.1} parent=59 // pred_region
          %558 = dma.done %s551, 1024
        $region64: #{tpu_custom_call.1} parent=59 // pred_fallthru
          _
        %s559 = sand.u32 %s39, 1
        %s560 = scalar_lea.sflag [#allocation7], %s559
        %s561 = sand.u32 %s89, 1
        %s562 = smul.addr %s561, 64
        %s563 = scalar_lea.vmem [#allocation6], %s562
        // Predicated region
        $region65: #{tpu_custom_call.1} parent=59 // pred_check
          %p564 = pneg %p102
        $region66: #{tpu_custom_call.1} parent=59 // pred_check_branch
          %566 = sbr.rel (%p564) target = $region68
        $region67: #{tpu_custom_call.1} parent=59 // pred_region
          %567 = dma.done %s560, 1024
        $region68: #{tpu_custom_call.1} parent=59 // pred_fallthru
          _
        %s568 = sand.u32 %s39, 1
        %s569 = scalar_lea.sflag [#allocation7], %s568
        %s570 = sand.u32 %s117, 1
        %s571 = smul.addr %s570, 16
        %s572 = scalar_lea.vmem [#allocation8], %s571
        // Predicated region
        $region69: #{tpu_custom_call.1} parent=59 // pred_check
          %p573 = pneg %p130
        $region70: #{tpu_custom_call.1} parent=59 // pred_check_branch
          %575 = sbr.rel (%p573) target = $region72
        $region71: #{tpu_custom_call.1} parent=59 // pred_region
          %576 = dma.done %s569, 256
        $region72: #{tpu_custom_call.1} parent=59 // pred_fallthru
          _
        %s577 = sand.u32 %s39, 1
        %s578 = scalar_lea.sflag [#allocation10], %s577
        %s579 = sand.u32 %s145, 1
        %s580 = smul.addr %s579, 16
        %s581 = scalar_lea.vmem [#allocation9], %s580
        // Predicated region
        $region73: #{tpu_custom_call.1} parent=59 // pred_check
          %p582 = pneg %p158
        $region74: #{tpu_custom_call.1} parent=59 // pred_check_branch
          %584 = sbr.rel (%p582) target = $region76
        $region75: #{tpu_custom_call.1} parent=59 // pred_region
          %585 = dma.done %s578, 256
        $region76: #{tpu_custom_call.1} parent=59 // pred_fallthru
          _
        %s586 = sand.u32 %s39, 1
        %s587 = scalar_lea.sflag [#allocation10], %s586
        %s588 = sand.u32 %s173, 1
        %s589 = smul.addr %s588, 64
        %s590 = scalar_lea.vmem [#allocation11], %s589
        // Predicated region
        $region77: #{tpu_custom_call.1} parent=59 // pred_check
          %p591 = pneg %p186
        $region78: #{tpu_custom_call.1} parent=59 // pred_check_branch
          %593 = sbr.rel (%p591) target = $region80
        $region79: #{tpu_custom_call.1} parent=59 // pred_region
          %594 = dma.done %s587, 1024
        $region80: #{tpu_custom_call.1} parent=59 // pred_fallthru
          _
        %s595 = sand.u32 %s39, 1
        %s596 = scalar_lea.sflag [#allocation13], %s595
        %s597 = sand.u32 %s201, 1
        %s598 = smul.addr %s597, 64
        %s599 = scalar_lea.vmem [#allocation12], %s598
        // Predicated region
        $region81: #{tpu_custom_call.1} parent=59 // pred_check
          %p600 = pneg %p214
        $region82: #{tpu_custom_call.1} parent=59 // pred_check_branch
          %602 = sbr.rel (%p600) target = $region84
        $region83: #{tpu_custom_call.1} parent=59 // pred_region
          %603 = dma.done %s596, 1024
        $region84: #{tpu_custom_call.1} parent=59 // pred_fallthru
          _
        %s604 = sand.u32 %s39, 1
        %s605 = scalar_lea.sflag [#allocation13], %s604
        %s606 = sand.u32 %s229, 1
        %s607 = smul.addr %s606, 16
        %s608 = scalar_lea.vmem [#allocation14], %s607
        // Predicated region
        $region85: #{tpu_custom_call.1} parent=59 // pred_check
          %p609 = pneg %p242
        $region86: #{tpu_custom_call.1} parent=59 // pred_check_branch
          %611 = sbr.rel (%p609) target = $region88
        $region87: #{tpu_custom_call.1} parent=59 // pred_region
          %612 = dma.done %s605, 256
        $region88: #{tpu_custom_call.1} parent=59 // pred_fallthru
          _
        %s613 = sand.u32 %s257, 1
        %s614 = scalar_lea.sflag [#allocation16], %s613
        %s615 = sand.u32 %s257, 1
        %s616 = smul.addr %s615, 16
        %s617 = scalar_lea.vmem [#allocation15], %s616
        // Predicated region
        $region89: #{tpu_custom_call.1} parent=59 // pred_check
          %p618 = pneg %p270
        $region90: #{tpu_custom_call.1} parent=59 // pred_check_branch
          %620 = sbr.rel (%p618) target = $region92
        $region91: #{tpu_custom_call.1} parent=59 // pred_region
          %621 = dma.done %s614, 256
        $region92: #{tpu_custom_call.1} parent=59 // pred_fallthru
          _
        %s622 = sand.u32 %s61, 1
        %s623 = scalar_lea.sflag [#allocation4], %s622
        %s624 = sand.u32 %s61, 1
        %s625 = smul.addr %s624, 64
        %s626 = scalar_lea.vmem [#allocation3], %s625
        %p627 = pneg %p74
        %p628 = pneg %p71
        %s629 = sand.u32 %s39, 1
        %s630 = scalar_lea.sflag [#allocation7], %s629
        %s631 = sand.u32 %s89, 1
        %s632 = smul.addr %s631, 64
        %s633 = scalar_lea.vmem [#allocation6], %s632
        %p634 = pneg %p102
        %p635 = pneg %p99
        %s636 = sand.u32 %s39, 1
        %s637 = scalar_lea.sflag [#allocation7], %s636
        %s638 = sand.u32 %s117, 1
        %s639 = smul.addr %s638, 16
        %s640 = scalar_lea.vmem [#allocation8], %s639
        %p641 = pneg %p130
        %p642 = pneg %p127
        %s643 = sand.u32 %s39, 1
        %s644 = scalar_lea.sflag [#allocation10], %s643
        %s645 = sand.u32 %s145, 1
        %s646 = smul.addr %s645, 16
        %s647 = scalar_lea.vmem [#allocation9], %s646
        %p648 = pneg %p158
        %p649 = pneg %p155
        %s650 = sand.u32 %s39, 1
        %s651 = scalar_lea.sflag [#allocation10], %s650
        %s652 = sand.u32 %s173, 1
        %s653 = smul.addr %s652, 64
        %s654 = scalar_lea.vmem [#allocation11], %s653
        %p655 = pneg %p186
        %p656 = pneg %p183
        %s657 = sand.u32 %s39, 1
        %s658 = scalar_lea.sflag [#allocation13], %s657
        %s659 = sand.u32 %s201, 1
        %s660 = smul.addr %s659, 64
        %s661 = scalar_lea.vmem [#allocation12], %s660
        %p662 = pneg %p214
        %p663 = pneg %p211
        %s664 = sand.u32 %s39, 1
        %s665 = scalar_lea.sflag [#allocation13], %s664
        %s666 = sand.u32 %s229, 1
        %s667 = smul.addr %s666, 16
        %s668 = scalar_lea.vmem [#allocation14], %s667
        %p669 = pneg %p242
        %p670 = pneg %p239
        %s671 = sand.u32 %s257, 1
        %s672 = scalar_lea.sflag [#allocation16], %s671
        %s673 = sand.u32 %s257, 1
        %s674 = smul.addr %s673, 16
        %s675 = scalar_lea.vmem [#allocation15], %s674
        %p676 = pneg %p270
        %p677 = pneg %p267
        %p678 = pneg %p291
        %p679 = pneg %p288
        %p680 = pneg %p312
        %p681 = pneg %p309
        %p682 = pneg %p338
        %p683 = pneg %p335
        %s684 = sand.u32 %s325, 1
        %s685 = scalar_lea.sflag [#allocation5], %s684
        %s686 = sand.u32 %s325, 1
        %s687 = smul.addr %s686, 8
        %s688 = scalar_lea.vmem [#allocation17], %s687
        %s689 = smul.u32 4, %s44
        %s690 = smul.u32 4, %s44
        %s691 = smul.u32 4, %s44
        %s692 = smul.u32 4, %s44
        %p693 = scmp.eq.s32.totalorder %s44, 0
        // Predicated region
        $region93: #{tpu_custom_call.1} parent=59 // pred_check
          %p694 = pneg %p693
        $region94: #{tpu_custom_call.1} parent=59 // pred_check_branch
          %696 = sbr.rel (%p694) target = $region96
        $region95: #{tpu_custom_call.1} parent=59 // pred_region
          %697 = vst [vmem:[#allocation2] sm:$0xff] 0.0
          %698 = vst [vmem:[#allocation2 + $0x8] sm:$0xff] 0.0
        $region96: #{tpu_custom_call.1} parent=59 // pred_fallthru
          _
        %v699 = vld [vmem:[%s9] sm:$0x3f]
        %v700 = vld [vmem:[%s9 + $0x8] sm:$0x3f]
        %v701 = vlaneseq
        %v702 = vshrl.u32 %v701, 7
        %v703 = vsub.s32 0, %v702
        %v704 = vrot.slane %v699, %v703
        %v705 = vlaneseq
        %v706 = vshrl.u32 %v705, 7
        %v707 = vsub.s32 0, %v706
        %v708 = vrot.slane %v700, %v707
        %v709 = vlaneseq
        %v710 = vshrl.u32 %v709, 7
        %v711 = vsub.s32 1, %v710
        %v712 = vrot.slane %v699, %v711
        %v713 = vlaneseq
        %v714 = vshrl.u32 %v713, 7
        %v715 = vsub.s32 1, %v714
        %v716 = vrot.slane %v700, %v715
        %v717 = vlaneseq
        %v718 = vshrl.u32 %v717, 7
        %v719 = vsub.s32 2, %v718
        %v720 = vrot.slane %v699, %v719
        %v721 = vlaneseq
        %v722 = vshrl.u32 %v721, 7
        %v723 = vsub.s32 2, %v722
        %v724 = vrot.slane %v700, %v723
        %v725 = vlaneseq
        %v726 = vshrl.u32 %v725, 7
        %v727 = vsub.s32 3, %v726
        %v728 = vrot.slane %v699, %v727
        %v729 = vlaneseq
        %v730 = vshrl.u32 %v729, 7
        %v731 = vsub.s32 3, %v730
        %v732 = vrot.slane %v700, %v731
        %v733 = vlaneseq
        %v734 = vshrl.u32 %v733, 7
        %v735 = vsub.s32 4, %v734
        %v736 = vrot.slane %v699, %v735
        %v737 = vlaneseq
        %v738 = vshrl.u32 %v737, 7
        %v739 = vsub.s32 4, %v738
        %v740 = vrot.slane %v700, %v739
        %v741 = vlaneseq
        %v742 = vshrl.u32 %v741, 7
        %v743 = vsub.s32 5, %v742
        %v744 = vrot.slane %v699, %v743
        %v745 = vlaneseq
        %v746 = vshrl.u32 %v745, 7
        %v747 = vsub.s32 5, %v746
        %v748 = vrot.slane %v700, %v747
        %v749 = vld [vmem:[%s8] sm:$0xff]
        %v750 = vld [vmem:[%s554] sm:$0xff]
        %v751 = vld [vmem:[%s554 + $0x8] sm:$0xff]
        %v752 = vld [vmem:[%s554 + $0x10] sm:$0xff]
        %v753 = vld [vmem:[%s554 + $0x18] sm:$0xff]
        %v754 = vld [vmem:[%s554 + $0x20] sm:$0xff]
        %v755 = vld [vmem:[%s554 + $0x28] sm:$0xff]
        %v756 = vld [vmem:[%s554 + $0x30] sm:$0xff]
        %v757 = vld [vmem:[%s554 + $0x38] sm:$0xff]
        %vm758 = vcmask 261120
        %v760 = vsel %vm758, %v749, 0
        %762 = vmatprep.subr.mxu0 %v751
        %763 = vmatpush1.msra.mxu0 %v750
        %764 = vmatprep.subr.mxu0 %v753
        %765 = vmatpush1.msra.mxu0 %v752
        %766 = vmatprep.subr.mxu0 %v755
        %767 = vmatpush1.msra.mxu0 %v754
        %768 = vmatprep.subr.mxu0 %v757
        %769 = vmatpush1.msra.mxu0 %v756
        %770 = vmatprep.subr.mxu0 0.0
        %771 = vmatpush1.msra.mxu0 0.0
        %772 = vmatprep.subr.mxu0 0.0
        %773 = vmatpush1.msra.mxu0 0.0
        %774 = vmatprep.subr.mxu0 0.0
        %775 = vmatpush1.msra.mxu0 0.0
        %776 = vmatprep.subr.mxu0 0.0
        %777 = vmatpush1.msra.mxu0 0.0
        %778 = vmatprep.subr.mxu0 0.0
        %779 = vmatpush1.msra.mxu0 0.0
        %780 = vmatprep.subr.mxu0 0.0
        %781 = vmatpush1.msra.mxu0 0.0
        %782 = vmatprep.subr.mxu0 0.0
        %783 = vmatpush1.msra.mxu0 0.0
        %784 = vmatprep.subr.mxu0 0.0
        %785 = vmatpush1.msra.mxu0 0.0
        %786 = vmatprep.subr.mxu0 0.0
        %787 = vmatpush1.msra.mxu0 0.0
        %788 = vmatprep.subr.mxu0 0.0
        %789 = vmatpush1.msra.mxu0 0.0
        %790 = vmatprep.subr.mxu0 0.0
        %791 = vmatpush1.msra.mxu0 0.0
        %792 = vmatprep.subr.mxu0 0.0
        %793 = vmatpush1.msra.mxu0 0.0
        %794 = vmatprep.subr.mxu0 0.0
        %795 = vmatpush1.msra.mxu0 0.0
        %796 = vmatprep.subr.mxu0 0.0
        %797 = vmatpush1.msra.mxu0 0.0
        %798 = vmatprep.subr.mxu0 0.0
        %799 = vmatpush1.msra.mxu0 0.0
        %800 = vmatprep.subr.mxu0 0.0
        %801 = vmatpush1.msra.mxu0 0.0
        %802 = vmatprep.subr.mxu0 0.0
        %803 = vmatpush1.msra.mxu0 0.0
        %804 = vmatprep.subr.mxu0 0.0
        %805 = vmatpush1.msra.mxu0 0.0
        %806 = vmatprep.subr.mxu0 0.0
        %807 = vmatpush1.msra.mxu0 0.0
        %808 = vmatprep.subr.mxu0 0.0
        %809 = vmatpush1.msra.mxu0 0.0
        %810 = vmatprep.subr.mxu0 0.0
        %811 = vmatpush1.msra.mxu0 0.0
        %812 = vmatprep.subr.mxu0 0.0
        %813 = vmatpush1.msra.mxu0 0.0
        %814 = vmatprep.subr.mxu0 0.0
        %815 = vmatpush1.msra.mxu0 0.0
        %816 = vmatprep.subr.mxu0 0.0
        %817 = vmatpush1.msra.mxu0 0.0
        %818 = vmatprep.subr.mxu0 0.0
        %819 = vmatpush1.msra.mxu0 0.0
        %820 = vmatprep.subr.mxu0 0.0
        %821 = vmatpush1.msra.mxu0 0.0
        %822 = vmatprep.subr.mxu0 0.0
        %823 = vmatpush1.msra.mxu0 0.0
        %824 = vmatprep.subr.mxu0 0.0
        %825 = vmatpush1.msra.mxu0 0.0
        %826 = vmatprep.mubr.f32.mxu0 0.0
        %827 = vmatmul.mubr.f32.gmra.mrb[0].mxu0 %v760
        %v828 = vpop.f32.mrb[0].mxu0
        %v829 = vadd.f32 0.0, %v828
        %v830 = vpop.f32.mrb[0].mxu0
        %v831 = vadd.f32 0.0, %v830
        %832 = vdwg.mxu0
        %v833 = vld [vmem:[%s563] sm:$0xff]
        %v834 = vld [vmem:[%s563 + $0x8] sm:$0xff]
        %v835 = vld [vmem:[%s563 + $0x10] sm:$0xff]
        %v836 = vld [vmem:[%s563 + $0x18] sm:$0xff]
        %v837 = vld [vmem:[%s563 + $0x20] sm:$0xff]
        %v838 = vld [vmem:[%s563 + $0x28] sm:$0xff]
        %v839 = vld [vmem:[%s563 + $0x30] sm:$0xff]
        %v840 = vld [vmem:[%s563 + $0x38] sm:$0xff]
        %841 = vmatprep.subr.mxu0 %v834
        %842 = vmatpush1.msra.mxu0 %v833
        %843 = vmatprep.subr.mxu0 %v836
        %844 = vmatpush1.msra.mxu0 %v835
        %845 = vmatprep.subr.mxu0 %v838
        %846 = vmatpush1.msra.mxu0 %v837
        %847 = vmatprep.subr.mxu0 %v840
        %848 = vmatpush1.msra.mxu0 %v839
        %849 = vmatprep.subr.mxu0 0.0
        %850 = vmatpush1.msra.mxu0 0.0
        %851 = vmatprep.subr.mxu0 0.0
        %852 = vmatpush1.msra.mxu0 0.0
        %853 = vmatprep.subr.mxu0 0.0
        %854 = vmatpush1.msra.mxu0 0.0
        %855 = vmatprep.subr.mxu0 0.0
        %856 = vmatpush1.msra.mxu0 0.0
        %857 = vmatprep.subr.mxu0 0.0
        %858 = vmatpush1.msra.mxu0 0.0
        %859 = vmatprep.subr.mxu0 0.0
        %860 = vmatpush1.msra.mxu0 0.0
        %861 = vmatprep.subr.mxu0 0.0
        %862 = vmatpush1.msra.mxu0 0.0
        %863 = vmatprep.subr.mxu0 0.0
        %864 = vmatpush1.msra.mxu0 0.0
        %865 = vmatprep.subr.mxu0 0.0
        %866 = vmatpush1.msra.mxu0 0.0
        %867 = vmatprep.subr.mxu0 0.0
        %868 = vmatpush1.msra.mxu0 0.0
        %869 = vmatprep.subr.mxu0 0.0
        %870 = vmatpush1.msra.mxu0 0.0
        %871 = vmatprep.subr.mxu0 0.0
        %872 = vmatpush1.msra.mxu0 0.0
        %873 = vmatprep.subr.mxu0 0.0
        %874 = vmatpush1.msra.mxu0 0.0
        %875 = vmatprep.subr.mxu0 0.0
        %876 = vmatpush1.msra.mxu0 0.0
        %877 = vmatprep.subr.mxu0 0.0
        %878 = vmatpush1.msra.mxu0 0.0
        %879 = vmatprep.subr.mxu0 0.0
        %880 = vmatpush1.msra.mxu0 0.0
        %881 = vmatprep.subr.mxu0 0.0
        %882 = vmatpush1.msra.mxu0 0.0
        %883 = vmatprep.subr.mxu0 0.0
        %884 = vmatpush1.msra.mxu0 0.0
        %885 = vmatprep.subr.mxu0 0.0
        %886 = vmatpush1.msra.mxu0 0.0
        %887 = vmatprep.subr.mxu0 0.0
        %888 = vmatpush1.msra.mxu0 0.0
        %889 = vmatprep.subr.mxu0 0.0
        %890 = vmatpush1.msra.mxu0 0.0
        %891 = vmatprep.subr.mxu0 0.0
        %892 = vmatpush1.msra.mxu0 0.0
        %893 = vmatprep.subr.mxu0 0.0
        %894 = vmatpush1.msra.mxu0 0.0
        %895 = vmatprep.subr.mxu0 0.0
        %896 = vmatpush1.msra.mxu0 0.0
        %897 = vmatprep.subr.mxu0 0.0
        %898 = vmatpush1.msra.mxu0 0.0
        %899 = vmatprep.subr.mxu0 0.0
        %900 = vmatpush1.msra.mxu0 0.0
        %901 = vmatprep.subr.mxu0 0.0
        %902 = vmatpush1.msra.mxu0 0.0
        %903 = vmatprep.subr.mxu0 0.0
        %904 = vmatpush1.msra.mxu0 0.0
        %905 = vmatprep.mubr.f32.mxu0 0.0
        %906 = vmatmul.mubr.f32.gmra.mrb[0].mxu0 %v760
        %v907 = vpop.f32.mrb[0].mxu0
        %v908 = vadd.f32 0.0, %v907
        %v909 = vpop.f32.mrb[0].mxu0
        %v910 = vadd.f32 0.0, %v909
        %911 = vdwg.mxu0
        %v912 = vld [vmem:[%s572] sm:$0xff]
        %v913 = vld [vmem:[%s572 + $0x8] sm:$0xff]
        %v914 = vadd.f32 %v912, 1e-08
        %v915 = vadd.f32 %v913, 1e-08
        %v916 = vrcp.pop %v914
        %v917 = vrcp.pop %v915
        %v918 = vlog2.pop %v914
        %v919 = vmul.f32 %v918, 0.6931472
        %v920 = vlog2.pop %v915
        %v921 = vmul.f32 %v920, 0.6931472
        %922 = vrot.lane.b32.xlu0 %v829, 127
        %v923 = vpop.permute.xlu0 %922
        %924 = vrot.lane.b32.xlu0 %v831, 127
        %v925 = vpop.permute.xlu0 %924
        %v926 = vlaneseq
        %v927 = vand.u32 %v926, 127
        %vm928 = vcmp.lt.s32.totalorder %v927, 127
        %v929 = vsel %vm928, %v923, %v925
        %v930 = vsel %vm928, %v925, %v923
        %931 = vrot.lane.b32.xlu0 %v829, 1
        %v932 = vpop.permute.xlu0 %931
        %933 = vrot.lane.b32.xlu0 %v831, 1
        %v934 = vpop.permute.xlu0 %933
        %vm935 = vcmp.lt.s32.totalorder %v927, 1
        %v936 = vsel %vm935, %v932, %v934
        %v937 = vsel %vm935, %v934, %v932
        %v938 = vmul.f32 %v704, %v929
        %v939 = vmul.f32 %v708, %v930
        %v940 = vmul.f32 %v712, %v829
        %v941 = vmul.f32 %v716, %v831
        %v942 = vadd.f32 %v938, %v940
        %v943 = vadd.f32 %v939, %v941
        %v944 = vmul.f32 %v720, %v937
        %v945 = vmul.f32 %v724, %v936
        %v946 = vadd.f32 %v942, %v944
        %v947 = vadd.f32 %v943, %v945
        %948 = vrot.lane.b32.xlu0 %v908, 112
        %v949 = vpop.permute.xlu0 %948
        %950 = vrot.lane.b32.xlu0 %v910, 112
        %v951 = vpop.permute.xlu0 %950
        %vm952 = vcmp.lt.s32.totalorder %v927, 112
        %v953 = vsel %vm952, %v949, %v951
        %v954 = vsel %vm952, %v951, %v949
        %955 = vrot.lane.b32.xlu0 %v908, 16
        %v956 = vpop.permute.xlu0 %955
        %957 = vrot.lane.b32.xlu0 %v910, 16
        %v958 = vpop.permute.xlu0 %957
        %vm959 = vcmp.lt.s32.totalorder %v927, 16
        %v960 = vsel %vm959, %v956, %v958
        %v961 = vsel %vm959, %v958, %v956
        %v962 = vmul.f32 %v728, %v953
        %v963 = vmul.f32 %v732, %v954
        %v964 = vmul.f32 %v736, %v908
        %v965 = vmul.f32 %v740, %v910
        %v966 = vadd.f32 %v962, %v964
        %v967 = vadd.f32 %v963, %v965
        %v968 = vmul.f32 %v744, %v961
        %v969 = vmul.f32 %v748, %v960
        %v970 = vadd.f32 %v966, %v968
        %v971 = vadd.f32 %v967, %v969
        %v972 = vadd.f32 %v946, %v970
        %v973 = vadd.f32 %v947, %v971
        %974 = vrot.lane.b32.xlu0 %v919, 127
        %v975 = vpop.permute.xlu0 %974
        %976 = vrot.lane.b32.xlu0 %v921, 127
        %v977 = vpop.permute.xlu0 %976
        %v978 = vsel %vm928, %v975, %v977
        %v979 = vsel %vm928, %v977, %v975
        %980 = vrot.lane.b32.xlu0 %v919, 1
        %v981 = vpop.permute.xlu0 %980
        %982 = vrot.lane.b32.xlu0 %v921, 1
        %v983 = vpop.permute.xlu0 %982
        %v984 = vsel %vm935, %v981, %v983
        %v985 = vsel %vm935, %v983, %v981
        %v986 = vmul.f32 %v704, %v978
        %v987 = vmul.f32 %v708, %v979
        %v988 = vmul.f32 %v712, %v919
        %v989 = vmul.f32 %v716, %v921
        %v990 = vadd.f32 %v986, %v988
        %v991 = vadd.f32 %v987, %v989
        %v992 = vmul.f32 %v720, %v985
        %v993 = vmul.f32 %v724, %v984
        %v994 = vadd.f32 %v990, %v992
        %v995 = vadd.f32 %v991, %v993
        %v996 = vmul.f32 %v829, %v994
        %v997 = vmul.f32 %v831, %v995
        %v998 = vadd.f32 %v972, %v996
        %v999 = vadd.f32 %v973, %v997
        %1000 = vrot.lane.b32.xlu0 %v919, 112
        %v1001 = vpop.permute.xlu0 %1000
        %1002 = vrot.lane.b32.xlu0 %v921, 112
        %v1003 = vpop.permute.xlu0 %1002
        %v1004 = vsel %vm952, %v1001, %v1003
        %v1005 = vsel %vm952, %v1003, %v1001
        %1006 = vrot.lane.b32.xlu0 %v919, 16
        %v1007 = vpop.permute.xlu0 %1006
        %1008 = vrot.lane.b32.xlu0 %v921, 16
        %v1009 = vpop.permute.xlu0 %1008
        %v1010 = vsel %vm959, %v1007, %v1009
        %v1011 = vsel %vm959, %v1009, %v1007
        %v1012 = vmul.f32 %v728, %v1004
        %v1013 = vmul.f32 %v732, %v1005
        %v1014 = vmul.f32 %v736, %v919
        %v1015 = vmul.f32 %v740, %v921
        %v1016 = vadd.f32 %v1012, %v1014
        %v1017 = vadd.f32 %v1013, %v1015
        %v1018 = vmul.f32 %v744, %v1011
        %v1019 = vmul.f32 %v748, %v1010
        %v1020 = vadd.f32 %v1016, %v1018
        %v1021 = vadd.f32 %v1017, %v1019
        %v1022 = vmul.f32 %v908, %v1020
        %v1023 = vmul.f32 %v910, %v1021
        %v1024 = vadd.f32 %v998, %v1022
        %v1025 = vadd.f32 %v999, %v1023
        %v1026 = vmul.f32 %v1024, %v916
        %v1027 = vmul.f32 %v1025, %v917
        %v1028 = vld [vmem:[%s581] sm:$0xff]
        %v1029 = vld [vmem:[%s581 + $0x8] sm:$0xff]
        %v1030 = vadd.f32 %v1028, %v1026
        %v1031 = vadd.f32 %v1029, %v1027
        %v1032 = vld [vmem:[%s590] sm:$0xff]
        %v1033 = vld [vmem:[%s590 + $0x8] sm:$0xff]
        %v1034 = vld [vmem:[%s590 + $0x10] sm:$0xff]
        %v1035 = vld [vmem:[%s590 + $0x18] sm:$0xff]
        %v1036 = vld [vmem:[%s590 + $0x20] sm:$0xff]
        %v1037 = vld [vmem:[%s590 + $0x28] sm:$0xff]
        %v1038 = vld [vmem:[%s590 + $0x30] sm:$0xff]
        %v1039 = vld [vmem:[%s590 + $0x38] sm:$0xff]
        %1040 = vmatprep.subr.mxu0 %v1033
        %1041 = vmatpush1.msra.mxu0 %v1032
        %1042 = vmatprep.subr.mxu0 %v1035
        %1043 = vmatpush1.msra.mxu0 %v1034
        %1044 = vmatprep.subr.mxu0 %v1037
        %1045 = vmatpush1.msra.mxu0 %v1036
        %1046 = vmatprep.subr.mxu0 %v1039
        %1047 = vmatpush1.msra.mxu0 %v1038
        %1048 = vmatprep.subr.mxu0 0.0
        %1049 = vmatpush1.msra.mxu0 0.0
        %1050 = vmatprep.subr.mxu0 0.0
        %1051 = vmatpush1.msra.mxu0 0.0
        %1052 = vmatprep.subr.mxu0 0.0
        %1053 = vmatpush1.msra.mxu0 0.0
        %1054 = vmatprep.subr.mxu0 0.0
        %1055 = vmatpush1.msra.mxu0 0.0
        %1056 = vmatprep.subr.mxu0 0.0
        %1057 = vmatpush1.msra.mxu0 0.0
        %1058 = vmatprep.subr.mxu0 0.0
        %1059 = vmatpush1.msra.mxu0 0.0
        %1060 = vmatprep.subr.mxu0 0.0
        %1061 = vmatpush1.msra.mxu0 0.0
        %1062 = vmatprep.subr.mxu0 0.0
        %1063 = vmatpush1.msra.mxu0 0.0
        %1064 = vmatprep.subr.mxu0 0.0
        %1065 = vmatpush1.msra.mxu0 0.0
        %1066 = vmatprep.subr.mxu0 0.0
        %1067 = vmatpush1.msra.mxu0 0.0
        %1068 = vmatprep.subr.mxu0 0.0
        %1069 = vmatpush1.msra.mxu0 0.0
        %1070 = vmatprep.subr.mxu0 0.0
        %1071 = vmatpush1.msra.mxu0 0.0
        %1072 = vmatprep.subr.mxu0 0.0
        %1073 = vmatpush1.msra.mxu0 0.0
        %1074 = vmatprep.subr.mxu0 0.0
        %1075 = vmatpush1.msra.mxu0 0.0
        %1076 = vmatprep.subr.mxu0 0.0
        %1077 = vmatpush1.msra.mxu0 0.0
        %1078 = vmatprep.subr.mxu0 0.0
        %1079 = vmatpush1.msra.mxu0 0.0
        %1080 = vmatprep.subr.mxu0 0.0
        %1081 = vmatpush1.msra.mxu0 0.0
        %1082 = vmatprep.subr.mxu0 0.0
        %1083 = vmatpush1.msra.mxu0 0.0
        %1084 = vmatprep.subr.mxu0 0.0
        %1085 = vmatpush1.msra.mxu0 0.0
        %1086 = vmatprep.subr.mxu0 0.0
        %1087 = vmatpush1.msra.mxu0 0.0
        %1088 = vmatprep.subr.mxu0 0.0
        %1089 = vmatpush1.msra.mxu0 0.0
        %1090 = vmatprep.subr.mxu0 0.0
        %1091 = vmatpush1.msra.mxu0 0.0
        %1092 = vmatprep.subr.mxu0 0.0
        %1093 = vmatpush1.msra.mxu0 0.0
        %1094 = vmatprep.subr.mxu0 0.0
        %1095 = vmatpush1.msra.mxu0 0.0
        %1096 = vmatprep.subr.mxu0 0.0
        %1097 = vmatpush1.msra.mxu0 0.0
        %1098 = vmatprep.subr.mxu0 0.0
        %1099 = vmatpush1.msra.mxu0 0.0
        %1100 = vmatprep.subr.mxu0 0.0
        %1101 = vmatpush1.msra.mxu0 0.0
        %1102 = vmatprep.subr.mxu0 0.0
        %1103 = vmatpush1.msra.mxu0 0.0
        %1104 = vmatprep.mubr.f32.mxu0 0.0
        %1105 = vmatmul.mubr.f32.gmra.mrb[0].mxu0 %v760
        %v1106 = vpop.f32.mrb[0].mxu0
        %v1107 = vadd.f32 0.0, %v1106
        %v1108 = vpop.f32.mrb[0].mxu0
        %v1109 = vadd.f32 0.0, %v1108
        %1110 = vdwg.mxu0
        %v1111 = vld [vmem:[%s599] sm:$0xff]
        %v1112 = vld [vmem:[%s599 + $0x8] sm:$0xff]
        %v1113 = vld [vmem:[%s599 + $0x10] sm:$0xff]
        %v1114 = vld [vmem:[%s599 + $0x18] sm:$0xff]
        %v1115 = vld [vmem:[%s599 + $0x20] sm:$0xff]
        %v1116 = vld [vmem:[%s599 + $0x28] sm:$0xff]
        %v1117 = vld [vmem:[%s599 + $0x30] sm:$0xff]
        %v1118 = vld [vmem:[%s599 + $0x38] sm:$0xff]
        %1119 = vmatprep.subr.mxu0 %v1112
        %1120 = vmatpush1.msra.mxu0 %v1111
        %1121 = vmatprep.subr.mxu0 %v1114
        %1122 = vmatpush1.msra.mxu0 %v1113
        %1123 = vmatprep.subr.mxu0 %v1116
        %1124 = vmatpush1.msra.mxu0 %v1115
        %1125 = vmatprep.subr.mxu0 %v1118
        %1126 = vmatpush1.msra.mxu0 %v1117
        %1127 = vmatprep.subr.mxu0 0.0
        %1128 = vmatpush1.msra.mxu0 0.0
        %1129 = vmatprep.subr.mxu0 0.0
        %1130 = vmatpush1.msra.mxu0 0.0
        %1131 = vmatprep.subr.mxu0 0.0
        %1132 = vmatpush1.msra.mxu0 0.0
        %1133 = vmatprep.subr.mxu0 0.0
        %1134 = vmatpush1.msra.mxu0 0.0
        %1135 = vmatprep.subr.mxu0 0.0
        %1136 = vmatpush1.msra.mxu0 0.0
        %1137 = vmatprep.subr.mxu0 0.0
        %1138 = vmatpush1.msra.mxu0 0.0
        %1139 = vmatprep.subr.mxu0 0.0
        %1140 = vmatpush1.msra.mxu0 0.0
        %1141 = vmatprep.subr.mxu0 0.0
        %1142 = vmatpush1.msra.mxu0 0.0
        %1143 = vmatprep.subr.mxu0 0.0
        %1144 = vmatpush1.msra.mxu0 0.0
        %1145 = vmatprep.subr.mxu0 0.0
        %1146 = vmatpush1.msra.mxu0 0.0
        %1147 = vmatprep.subr.mxu0 0.0
        %1148 = vmatpush1.msra.mxu0 0.0
        %1149 = vmatprep.subr.mxu0 0.0
        %1150 = vmatpush1.msra.mxu0 0.0
        %1151 = vmatprep.subr.mxu0 0.0
        %1152 = vmatpush1.msra.mxu0 0.0
        %1153 = vmatprep.subr.mxu0 0.0
        %1154 = vmatpush1.msra.mxu0 0.0
        %1155 = vmatprep.subr.mxu0 0.0
        %1156 = vmatpush1.msra.mxu0 0.0
        %1157 = vmatprep.subr.mxu0 0.0
        %1158 = vmatpush1.msra.mxu0 0.0
        %1159 = vmatprep.subr.mxu0 0.0
        %1160 = vmatpush1.msra.mxu0 0.0
        %1161 = vmatprep.subr.mxu0 0.0
        %1162 = vmatpush1.msra.mxu0 0.0
        %1163 = vmatprep.subr.mxu0 0.0
        %1164 = vmatpush1.msra.mxu0 0.0
        %1165 = vmatprep.subr.mxu0 0.0
        %1166 = vmatpush1.msra.mxu0 0.0
        %1167 = vmatprep.subr.mxu0 0.0
        %1168 = vmatpush1.msra.mxu0 0.0
        %1169 = vmatprep.subr.mxu0 0.0
        %1170 = vmatpush1.msra.mxu0 0.0
        %1171 = vmatprep.subr.mxu0 0.0
        %1172 = vmatpush1.msra.mxu0 0.0
        %1173 = vmatprep.subr.mxu0 0.0
        %1174 = vmatpush1.msra.mxu0 0.0
        %1175 = vmatprep.subr.mxu0 0.0
        %1176 = vmatpush1.msra.mxu0 0.0
        %1177 = vmatprep.subr.mxu0 0.0
        %1178 = vmatpush1.msra.mxu0 0.0
        %1179 = vmatprep.subr.mxu0 0.0
        %1180 = vmatpush1.msra.mxu0 0.0
        %1181 = vmatprep.subr.mxu0 0.0
        %1182 = vmatpush1.msra.mxu0 0.0
        %1183 = vmatprep.mubr.f32.mxu0 0.0
        %1184 = vmatmul.mubr.f32.gmra.mrb[0].mxu0 %v760
        %v1185 = vpop.f32.mrb[0].mxu0
        %v1186 = vadd.f32 0.0, %v1185
        %v1187 = vpop.f32.mrb[0].mxu0
        %v1188 = vadd.f32 0.0, %v1187
        %1189 = vdwg.mxu0
        %v1190 = vld [vmem:[%s608] sm:$0xff]
        %v1191 = vld [vmem:[%s608 + $0x8] sm:$0xff]
        %v1192 = vadd.f32 %v1190, 1e-08
        %v1193 = vadd.f32 %v1191, 1e-08
        %v1194 = vrcp.pop %v1192
        %v1195 = vrcp.pop %v1193
        %v1196 = vlog2.pop %v1192
        %v1197 = vmul.f32 %v1196, 0.6931472
        %v1198 = vlog2.pop %v1193
        %v1199 = vmul.f32 %v1198, 0.6931472
        %1200 = vrot.lane.b32.xlu0 %v1107, 127
        %v1201 = vpop.permute.xlu0 %1200
        %1202 = vrot.lane.b32.xlu0 %v1109, 127
        %v1203 = vpop.permute.xlu0 %1202
        %v1204 = vsel %vm928, %v1201, %v1203
        %v1205 = vsel %vm928, %v1203, %v1201
        %1206 = vrot.lane.b32.xlu0 %v1107, 1
        %v1207 = vpop.permute.xlu0 %1206
        %1208 = vrot.lane.b32.xlu0 %v1109, 1
        %v1209 = vpop.permute.xlu0 %1208
        %v1210 = vsel %vm935, %v1207, %v1209
        %v1211 = vsel %vm935, %v1209, %v1207
        %v1212 = vmul.f32 %v704, %v1204
        %v1213 = vmul.f32 %v708, %v1205
        %v1214 = vmul.f32 %v712, %v1107
        %v1215 = vmul.f32 %v716, %v1109
        %v1216 = vadd.f32 %v1212, %v1214
        %v1217 = vadd.f32 %v1213, %v1215
        %v1218 = vmul.f32 %v720, %v1211
        %v1219 = vmul.f32 %v724, %v1210
        %v1220 = vadd.f32 %v1216, %v1218
        %v1221 = vadd.f32 %v1217, %v1219
        %1222 = vrot.lane.b32.xlu0 %v1186, 112
        %v1223 = vpop.permute.xlu0 %1222
        %1224 = vrot.lane.b32.xlu0 %v1188, 112
        %v1225 = vpop.permute.xlu0 %1224
        %v1226 = vsel %vm952, %v1223, %v1225
        %v1227 = vsel %vm952, %v1225, %v1223
        %1228 = vrot.lane.b32.xlu0 %v1186, 16
        %v1229 = vpop.permute.xlu0 %1228
        %1230 = vrot.lane.b32.xlu0 %v1188, 16
        %v1231 = vpop.permute.xlu0 %1230
        %v1232 = vsel %vm959, %v1229, %v1231
        %v1233 = vsel %vm959, %v1231, %v1229
        %v1234 = vmul.f32 %v728, %v1226
        %v1235 = vmul.f32 %v732, %v1227
        %v1236 = vmul.f32 %v736, %v1186
        %v1237 = vmul.f32 %v740, %v1188
        %v1238 = vadd.f32 %v1234, %v1236
        %v1239 = vadd.f32 %v1235, %v1237
        %v1240 = vmul.f32 %v744, %v1233
        %v1241 = vmul.f32 %v748, %v1232
        %v1242 = vadd.f32 %v1238, %v1240
        %v1243 = vadd.f32 %v1239, %v1241
        %v1244 = vadd.f32 %v1220, %v1242
        %v1245 = vadd.f32 %v1221, %v1243
        %1246 = vrot.lane.b32.xlu0 %v1197, 127
        %v1247 = vpop.permute.xlu0 %1246
        %1248 = vrot.lane.b32.xlu0 %v1199, 127
        %v1249 = vpop.permute.xlu0 %1248
        %v1250 = vsel %vm928, %v1247, %v1249
        %v1251 = vsel %vm928, %v1249, %v1247
        %1252 = vrot.lane.b32.xlu0 %v1197, 1
        %v1253 = vpop.permute.xlu0 %1252
        %1254 = vrot.lane.b32.xlu0 %v1199, 1
        %v1255 = vpop.permute.xlu0 %1254
        %v1256 = vsel %vm935, %v1253, %v1255
        %v1257 = vsel %vm935, %v1255, %v1253
        %v1258 = vmul.f32 %v704, %v1250
        %v1259 = vmul.f32 %v708, %v1251
        %v1260 = vmul.f32 %v712, %v1197
        %v1261 = vmul.f32 %v716, %v1199
        %v1262 = vadd.f32 %v1258, %v1260
        %v1263 = vadd.f32 %v1259, %v1261
        %v1264 = vmul.f32 %v720, %v1257
        %v1265 = vmul.f32 %v724, %v1256
        %v1266 = vadd.f32 %v1262, %v1264
        %v1267 = vadd.f32 %v1263, %v1265
        %v1268 = vmul.f32 %v1107, %v1266
        %v1269 = vmul.f32 %v1109, %v1267
        %v1270 = vadd.f32 %v1244, %v1268
        %v1271 = vadd.f32 %v1245, %v1269
        %1272 = vrot.lane.b32.xlu0 %v1197, 112
        %v1273 = vpop.permute.xlu0 %1272
        %1274 = vrot.lane.b32.xlu0 %v1199, 112
        %v1275 = vpop.permute.xlu0 %1274
        %v1276 = vsel %vm952, %v1273, %v1275
        %v1277 = vsel %vm952, %v1275, %v1273
        %1278 = vrot.lane.b32.xlu0 %v1197, 16
        %v1279 = vpop.permute.xlu0 %1278
        %1280 = vrot.lane.b32.xlu0 %v1199, 16
        %v1281 = vpop.permute.xlu0 %1280
        %v1282 = vsel %vm959, %v1279, %v1281
        %v1283 = vsel %vm959, %v1281, %v1279
        %v1284 = vmul.f32 %v728, %v1276
        %v1285 = vmul.f32 %v732, %v1277
        %v1286 = vmul.f32 %v736, %v1197
        %v1287 = vmul.f32 %v740, %v1199
        %v1288 = vadd.f32 %v1284, %v1286
        %v1289 = vadd.f32 %v1285, %v1287
        %v1290 = vmul.f32 %v744, %v1283
        %v1291 = vmul.f32 %v748, %v1282
        %v1292 = vadd.f32 %v1288, %v1290
        %v1293 = vadd.f32 %v1289, %v1291
        %v1294 = vmul.f32 %v1186, %v1292
        %v1295 = vmul.f32 %v1188, %v1293
        %v1296 = vadd.f32 %v1270, %v1294
        %v1297 = vadd.f32 %v1271, %v1295
        %v1298 = vmul.f32 %v1296, %v1194
        %v1299 = vmul.f32 %v1297, %v1195
        %v1300 = vld [vmem:[%s617] sm:$0xff]
        %v1301 = vld [vmem:[%s617 + $0x8] sm:$0xff]
        %v1302 = vadd.f32 %v1300, %v1298
        %v1303 = vadd.f32 %v1301, %v1299
        %v1304 = vsub.f32 %v1030, %v1302
        %v1305 = vsub.f32 %v1031, %v1303
        %v1306 = vld [vmem:[#allocation2] sm:$0xff]
        %v1307 = vld [vmem:[#allocation2 + $0x8] sm:$0xff]
        %v1308 = vmul.f32 %v1304, %v1304
        %v1309 = vmul.f32 %v1305, %v1305
        %v1310 = vadd.f32 %v1306, %v1308
        %v1311 = vadd.f32 %v1307, %v1309
        %1312 = vst [vmem:[#allocation2] sm:$0xff] %v1310
        %1313 = vst [vmem:[#allocation2 + $0x8] sm:$0xff] %v1311
        %p1314 = scmp.eq.s32.totalorder %s44, 1
        // Predicated region
        $region97: #{tpu_custom_call.1} parent=59 // pred_check
          %p1315 = pneg %p1314
        $region98: #{tpu_custom_call.1} parent=59 // pred_check_branch
          %1317 = sbr.rel (%p1315) target = $region100
        $region99: #{tpu_custom_call.1} parent=59 // pred_region
          %v1318 = vld [vmem:[#allocation2] sm:$0xff]
          %v1319 = vld [vmem:[#allocation2 + $0x8] sm:$0xff]
          %v1320 = vadd.f32 %v1318, %v1319
          %1321 = vadd.xlane.f32.xlu0 %v1320
          %v1322 = vpop.xlane.xlu0 %1321
          %v1323 = vrot.slane %v1322, 4
          %v1324 = vadd.f32 %v1322, %v1323
          %v1325 = vrot.slane %v1324, 2
          %v1326 = vadd.f32 %v1324, %v1325
          %v1327 = vrot.slane %v1326, 1
          %v1328 = vadd.f32 %v1326, %v1327
          %s1329 = vtos %v1328
          %v1330 = vstv %s1329
          %1331 = vst [vmem:[%s688] sm:$0xff] %v1330
        $region100: #{tpu_custom_call.1} parent=59 // pred_fallthru
          _
        %s1332 = sand.u32 %s325, 1
        %s1333 = scalar_lea.sflag [#allocation5], %s1332
        %s1334 = sand.u32 %s325, 1
        %s1335 = smul.addr %s1334, 8
        %s1336 = scalar_lea.vmem [#allocation17], %s1335
        // Predicated region
        $region101: #{tpu_custom_call.1} parent=59 // pred_check
          %p1337 = pneg %p335
        $region102: #{tpu_custom_call.1} parent=59 // pred_check_branch
          %1339 = sbr.rel (%p1337) target = $region104
        $region103: #{tpu_custom_call.1} parent=59 // pred_region
          %s1341 = ssub.s32 128, 128
          %1342 = vsyncadd %s1333, %s1341
          %s1343 = smul.addr %s43, 128
          %s1344 = scalar_lea.hbm %s10, %s1343
          %s1346 = sshll.u32 %s1336, 4
          %s1347 = int_to_ptr.vmem [resolvable:$true] %s1346
          %1349 = dma.vmem_to_hbm [thread:$0]  %s1347, 128, %s1344, %s1333
        $region104: #{tpu_custom_call.1} parent=59 // pred_fallthru
          _
      $region60: #{tpu_custom_call.1} parent=5 // pred_fallthru
        _
      %p1350 = scmp.le.s32.totalorder 2, %s34
      // Predicated region
      $region105: #{tpu_custom_call.1} parent=5 // pred_check
        %p1351 = pneg %p1350
      $region106: #{tpu_custom_call.1} parent=5 // pred_check_branch
        %1353 = sbr.rel (%p1351) target = $region108
      $region107: #{tpu_custom_call.1} parent=5 // pred_region
        %s1354 = ssub.s32 %s34, 2
        // Predicated region
        $region109: #{tpu_custom_call.1} parent=107 // pred_check
          %p1355 = pneg %p341
        $region110: #{tpu_custom_call.1} parent=107 // pred_check_branch
          %1357 = sbr.rel (%p1355) target = $region112
        $region111: #{tpu_custom_call.1} parent=107 // pred_region
          %s1358 = sand.u32 %s326, 1
          %s1359 = scalar_lea.sflag [#allocation5], %s1358
          %s1360 = sand.u32 %s326, 1
          %s1361 = smul.addr %s1360, 8
          %s1362 = scalar_lea.vmem [#allocation17], %s1361
          %1363 = dma.done %s1359, 128
        $region112: #{tpu_custom_call.1} parent=107 // pred_fallthru
          _
      $region108: #{tpu_custom_call.1} parent=5 // pred_fallthru
        _
    $region6: #{tpu_custom_call.1} parent=1 // loop_footer
      %s38 = sadd.s32 1, %s34
    $region7: #{tpu_custom_call.1} parent=1 // loop_footer_branch
      %33 = sbr.rel target = $region3
    $region8: #{tpu_custom_call.1} parent=1 // loop_exit
      _
    %1364 = vsyncpa [#allocation4], 1
    %s1365 = scalar_lea.sflag [#allocation4], 1
    %1366 = vsyncpa %s1365, 1
    %1367 = vsyncpa [#allocation7], 1
    %s1368 = scalar_lea.sflag [#allocation7], 1
    %1369 = vsyncpa %s1368, 1
    %1370 = vsyncpa [#allocation10], 1
    %s1371 = scalar_lea.sflag [#allocation10], 1
    %1372 = vsyncpa %s1371, 1
    %1373 = vsyncpa [#allocation13], 1
    %s1374 = scalar_lea.sflag [#allocation13], 1
    %1375 = vsyncpa %s1374, 1
    %1376 = vsyncpa [#allocation16], 1
    %s1377 = scalar_lea.sflag [#allocation16], 1
    %1378 = vsyncpa %s1377, 1
    %1379 = vsyncpa [#allocation5], 1
    %s1380 = scalar_lea.sflag [#allocation5], 1
    %1381 = vsyncpa %s1380, 1

</llo_original>
